<compile_context>
chip_gen: v5e
topology: v5e:2x2
jax: 0.10.0
libtpu: 0.0.40
codegen_flags: <defaults>
</compile_context>

<pallas_src>
import functools

import jax
import jax.numpy as jnp
from jax import lax
from jax.experimental import pallas as pl
from jax.experimental.pallas import tpu as pltpu

_LANES = 128
_NEG_INF = -1e30


def _plan_tiles(n):
    """Pick (tm, tn, n_pad).

    n is padded to a multiple of 128 (minimal padding, <=127 rows); tiles are
    the largest of (512, 256, 128) / (256, 128) dividing the padded extent so
    blocks stay (8,128)-aligned.  tm drops to 128 when that is the only way to
    get >= 2 query tiles (megacore 'parallel' axis on v7x).
    """
    n_pad = ((n + _LANES - 1) // _LANES) * _LANES
    tn = next(t for t in (512, 256, 128) if n_pad % t == 0)
    tm = next(t for t in (256, 128) if n_pad % t == 0)
    if n_pad // tm < 2 and tm > _LANES:
        tm = _LANES
    return tm, tn, n_pad


def _msc_kernel(qf_ref, kf_ref, ql_ref, kl_ref, qsum_ref, ksum_ref,   # inputs
                out_ref,                                              # output
                m_sc, l_sc, s1_sc, w_sc, den_sc,                      # scratch
                *, inv_temp, c_thr, inv_cthr, tm, tn, n_real, has_pad):
    q_idx = pl.program_id(0)
    k_idx = pl.program_id(1)
    nk = pl.num_programs(1)
    ng = tn // _LANES          # 128-wide lane groups per key tile
    q_lo = q_idx * tm
    k_lo = k_idx * tn

    @pl.when(k_idx == 0)
    def _init():
        m_sc[...] = jnp.full_like(m_sc, _NEG_INF)
        l_sc[...] = jnp.zeros_like(l_sc)
        s1_sc[...] = jnp.zeros_like(s1_sc)
        w_sc[...] = jnp.zeros_like(w_sc)
        den_sc[...] = jnp.zeros_like(den_sc)

    # ---- MXU: feature similarities & label intersections (bf16 in, f32 acc) --
    sims = lax.dot_general(qf_ref[...], kf_ref[...], (((1,), (0,)), ((), ())),
                           preferred_element_type=jnp.float32) * inv_temp
    inter = lax.dot_general(ql_ref[...], kl_ref[...], (((1,), (0,)), ((), ())),
                            preferred_element_type=jnp.float32)

    qs = jnp.broadcast_to(qsum_ref[...], (tm, _LANES))   # query label sums
    ks = ksum_ref[...]                                   # (1, tn) key label sums

    # Only diagonal-touching tiles (and the padded tail tile) pay for masking.
    touches_diag = jnp.logical_and(q_lo < k_lo + tn, k_lo < q_lo + tm)
    if has_pad:
        needs_mask = jnp.logical_or(touches_diag, k_idx == nk - 1)
    else:
        needs_mask = touches_diag

    def step(masked):
        # ---- pass 1: per-lane running max (diag included, padding excluded) --
        tile_max = None
        for g in range(ng):
            sl = slice(g * _LANES, (g + 1) * _LANES)
            s_g = sims[:, sl]
            if masked and has_pad:
                col = k_lo + g * _LANES + lax.broadcasted_iota(
                    jnp.int32, (tm, _LANES), 1)
                s_g = jnp.where(col < n_real, s_g, _NEG_INF)
            tile_max = s_g if tile_max is None else jnp.maximum(tile_max, s_g)
        m_prev = m_sc[...]
        m_new = jnp.maximum(m_prev, tile_max)
        alpha = jnp.exp(m_prev - m_new)

        # ---- pass 2: fused exp-sum + mask/weight partials, per lane slot -----
        p_sum = jnp.zeros((tm, _LANES), jnp.float32)
        s1_p = jnp.zeros((tm, _LANES), jnp.float32)
        w_p = jnp.zeros((tm, _LANES), jnp.float32)
        d_p = jnp.zeros((tm, _LANES), jnp.float32)
        if masked:
            row = q_lo + lax.broadcasted_iota(jnp.int32, (tm, _LANES), 0)
        for g in range(ng):
            sl = slice(g * _LANES, (g + 1) * _LANES)
            s_g = sims[:, sl]
            i_g = inter[:, sl]
            u_g = (qs + ks[:, sl]) - i_g + 1e-8          # union + eps
            keep = i_g >= c_thr * u_g                    # divide-free jaccard test
            p_g = jnp.exp(s_g - m_new)
            if masked:
                col = k_lo + g * _LANES + lax.broadcasted_iota(
                    jnp.int32, (tm, _LANES), 1)
                valid = row != col                       # drop self-contrast
                if has_pad:
                    valid = jnp.logical_and(valid, col < n_real)
                keep = jnp.logical_and(keep, valid)
                p_g = jnp.where(valid, p_g, 0.0)
            keep_f = keep.astype(jnp.float32)
            # weight = jaccard / (c_thr + eps); reciprocal on the EUP slot
            mw_g = keep_f * i_g * pl.reciprocal(u_g, approx=True) * inv_cthr
            p_sum += p_g
            d_p += keep_f
            w_p += mw_g
            s1_p += mw_g * s_g
        m_sc[...] = m_new
        l_sc[...] = l_sc[...] * alpha + p_sum
        s1_sc[...] += s1_p
        w_sc[...] += w_p
        den_sc[...] += d_p

    @pl.when(needs_mask)
    def _masked():
        step(masked=True)

    @pl.when(jnp.logical_not(needs_mask))
    def _fast():
        step(masked=False)

    @pl.when(k_idx == nk - 1)
    def _finalize():
        # Single cross-lane (XLU) pass per query tile: split-softmax merge of the
        # per-lane accumulators + lane sums of the mask/weight partials.
        m_l = m_sc[...]
        row_max = jnp.max(m_l, axis=1, keepdims=True)
        exp_sum = jnp.sum(l_sc[...] * jnp.exp(m_l - row_max), axis=1, keepdims=True)
        s1 = jnp.sum(s1_sc[...], axis=1, keepdims=True)
        w = jnp.sum(w_sc[...], axis=1, keepdims=True)
        den = jnp.sum(den_sc[...], axis=1, keepdims=True)
        log_den = row_max + jnp.log(exp_sum + 1e-8)
        out_ref[...] = (s1 - log_den * w) / (den + 1e-8)
        # TODO(synk): emit lane-dense (1, tm) output rows to avoid masked
        # vst.msk partial stores (minor; finalize runs once per query tile).


def multi_supcon_loss(features, labels, *, temperature=0.07,
                      similarity_threshold=0.5, c_threshold=0.3,
                      matmul_dtype=jnp.bfloat16):
    """features: [B, V, ...] (extra dims flattened), labels: [B, L] multi-hot.

    `similarity_threshold` is accepted but unused (mirrors the PyTorch module).
    `matmul_dtype` controls the MXU input precision (bf16 default; f32 for
    bit-accurate verification).
    """
    if features.ndim < 3:
        raise ValueError("`features` needs to be [batch_size, n_views, feature_dim].")
    B, V = features.shape[0], features.shape[1]
    feats = features.reshape(B, V, -1).astype(jnp.float32)
    D = feats.shape[-1]
    N = B * V

    # contrast_feature = cat(unbind(features, dim=1), dim=0) -> view-major (N, D)
    contrast = jnp.transpose(feats, (1, 0, 2)).reshape(N, D)
    lab_full = jnp.tile(labels.astype(jnp.float32), (V, 1))           # (N, L)
    L = lab_full.shape[1]
    lsum = jnp.sum(lab_full, axis=1)                                  # (N,)

    tm, tn, n_pad = _plan_tiles(N)
    pad = n_pad - N

    # Pad to aligned tiles; padded rows/cols carry zero features & labels, are
    # masked out of the exp-sum in-kernel, and excluded from the mean below.
    contrast = jnp.pad(contrast, ((0, pad), (0, 0)))
    lab_full = jnp.pad(lab_full, ((0, pad), (0, 0)))
    lsum = jnp.pad(lsum, (0, pad))

    cf = contrast.astype(matmul_dtype)
    lf = lab_full.astype(matmul_dtype)
    qf, kf = cf, cf.T                       # keys pre-transposed: (D, n_pad)
    ql, kl = lf, lf.T                       # (L, n_pad)
    qsum = lsum.reshape(n_pad, 1)
    ksum = lsum.reshape(1, n_pad)

    nq, nk = n_pad // tm, n_pad // tn

    kernel = functools.partial(
        _msc_kernel,
        inv_temp=1.0 / float(temperature),
        c_thr=float(c_threshold),
        inv_cthr=1.0 / (float(c_threshold) + 1e-8),
        tm=tm, tn=tn, n_real=N, has_pad=pad > 0)

    mlpp = pl.pallas_call(
        kernel,
        out_shape=jax.ShapeDtypeStruct((n_pad, 1), jnp.float32),
        grid_spec=pltpu.PrefetchScalarGridSpec(
            num_scalar_prefetch=0,
            grid=(nq, nk),
            in_specs=[
                pl.BlockSpec((tm, D), lambda i, k: (i, 0)),   # query features
                pl.BlockSpec((D, tn), lambda i, k: (0, k)),   # key features (pre-T)
                pl.BlockSpec((tm, L), lambda i, k: (i, 0)),   # query labels
                pl.BlockSpec((L, tn), lambda i, k: (0, k)),   # key labels (pre-T)
                pl.BlockSpec((tm, 1), lambda i, k: (i, 0)),   # query label sums
                pl.BlockSpec((1, tn), lambda i, k: (0, k)),   # key label sums
            ],
            out_specs=pl.BlockSpec((tm, 1), lambda i, k: (i, 0)),
            scratch_shapes=[pltpu.VMEM((tm, _LANES), jnp.float32)] * 5,
        ),
        compiler_params=pltpu.CompilerParams(
            dimension_semantics=("parallel", "arbitrary"),
            vmem_limit_bytes=64 * 1024 * 1024),
    )(qf, kf, ql, kl, qsum, ksum)

    mlpp = mlpp[:N, 0]                       # drop padded rows
    return -(temperature * jnp.mean(mlpp))


def _reference(features, labels, temperature=0.07, c_thr=0.3):
    """Pure-JAX mirror of the PyTorch forward (for verification)."""
    B, V = features.shape[0], features.shape[1]
    feats = features.reshape(B, V, -1).astype(jnp.float32)
    contrast = jnp.concatenate([feats[:, v, :] for v in range(V)], axis=0)
    lab = labels.astype(jnp.float32)
    inter = lab @ lab.T
    lsum = lab.sum(1, keepdims=True)
    union = lsum + lsum.T - inter
    jac = inter / (union + 1e-8)
    mask = (jac >= c_thr).astype(jnp.float32)
    weights = jnp.tile(jac / (c_thr + 1e-8), (V, V))
    sims = contrast @ contrast.T / temperature
    logits = sims - sims.max(1, keepdims=True)
    mask = jnp.tile(mask, (V, V))
    N = B * V
    logits_mask = 1.0 - jnp.eye(N, dtype=jnp.float32)
    mask = mask * logits_mask
    exp_logits = jnp.exp(logits) * logits_mask
    log_prob = logits - jnp.log(exp_logits.sum(1, keepdims=True) + 1e-8)
    mlpp = (mask * log_prob * weights).sum(1) / (mask.sum(1) + 1e-8)
    return -(temperature * mlpp).mean()


if __name__ == "__main__":
    key = jax.random.PRNGKey(0)
    k1, k2, k3, k4, k5, k6 = jax.random.split(key, 6)

    # ---- 1) small: batch=4, n_views=2, spatial 8x8 -> D=64, 6 classes --------
    feats_s = jax.random.normal(k1, (4, 2, 8, 8), dtype=jnp.float32)
    labs_s = jax.random.bernoulli(k2, 0.5, (4, 6)).astype(jnp.int32)
    ref_s = _reference(feats_s, labs_s)

    out_f32 = jax.block_until_ready(
        multi_supcon_loss(feats_s, labs_s, matmul_dtype=jnp.float32))
    assert jnp.allclose(out_f32, ref_s, rtol=1e-2, atol=1e-2), (out_f32, ref_s)

    out_bf16 = jax.block_until_ready(multi_supcon_loss(feats_s, labs_s))
    assert jnp.allclose(out_bf16, ref_s, rtol=3e-2, atol=3e-2), (out_bf16, ref_s)

    # ---- 2) N not a multiple of 128 -> exercises the padded tail tile --------
    feats_p = jax.random.normal(k3, (100, 2, 64), dtype=jnp.float32)   # N=200->256
    labs_p = jax.random.bernoulli(k4, 0.5, (100, 6)).astype(jnp.int32)
    ref_p = _reference(feats_p, labs_p)
    out_p = jax.block_until_ready(
        multi_supcon_loss(feats_p, labs_p, matmul_dtype=jnp.float32))
    assert jnp.allclose(out_p, ref_p, rtol=1e-2, atol=1e-2), (out_p, ref_p)

    # ---- 3) multi-tile grid with off-diagonal fast path (N=1024: 4x2 grid) ---
    feats_l = jax.random.normal(k5, (512, 2, 64), dtype=jnp.float32)
    labs_l = jax.random.bernoulli(k6, 0.5, (512, 6)).astype(jnp.int32)
    ref_l = _reference(feats_l, labs_l)
    out_l = jax.block_until_ready(multi_supcon_loss(feats_l, labs_l))
    assert jnp.allclose(out_l, ref_l, rtol=3e-2, atol=3e-2), (out_l, ref_l)

    print("KERNEL_OK")
</pallas_src>

<mosaic_0001>
module attributes {stable_mosaic.version = 11 : i64} {
  func.func @_msc_kernel(%arg0: i32, %arg1: i32, %arg2: memref<128x64xf32, #tpu.memory_space<vmem>>, %arg3: memref<64x128xf32, #tpu.memory_space<vmem>>, %arg4: memref<128x6xf32, #tpu.memory_space<vmem>>, %arg5: memref<6x128xf32, #tpu.memory_space<vmem>>, %arg6: memref<128x1xf32, #tpu.memory_space<vmem>>, %arg7: memref<1x128xf32, #tpu.memory_space<vmem>>, %arg8: memref<128x1xf32, #tpu.memory_space<vmem>>, %arg9: memref<128x128xf32, #tpu.memory_space<vmem>>, %arg10: memref<128x128xf32, #tpu.memory_space<vmem>>, %arg11: memref<128x128xf32, #tpu.memory_space<vmem>>, %arg12: memref<128x128xf32, #tpu.memory_space<vmem>>, %arg13: memref<128x128xf32, #tpu.memory_space<vmem>>) attributes {dimension_semantics = [#tpu.dimension_semantics<parallel>, #tpu.dimension_semantics<arbitrary>], iteration_bounds = array<i64: 1, 1>, scalar_prefetch = 0 : i64, scratch_operands = 5 : i64, tpu.core_type = #tpu.core_type<tc>, window_params = [{transform_indices = @transform_0, window_bounds = array<i64: 128, 64>}, {transform_indices = @transform_1, window_bounds = array<i64: 64, 128>}, {transform_indices = @transform_2, window_bounds = array<i64: 128, 6>}, {transform_indices = @transform_3, window_bounds = array<i64: 6, 128>}, {transform_indices = @transform_4, window_bounds = array<i64: 128, 1>}, {transform_indices = @transform_5, window_bounds = array<i64: 1, 128>}, {transform_indices = @transform_6, window_bounds = array<i64: 128, 1>}]} {
    %c128_i32 = arith.constant 128 : i32
    %0 = arith.muli %arg0, %c128_i32 : i32
    %c128_i32_0 = arith.constant 128 : i32
    %1 = arith.muli %arg1, %c128_i32_0 : i32
    %c0_i32 = arith.constant 0 : i32
    %2 = arith.cmpi eq, %arg1, %c0_i32 : i32
    %3 = arith.extui %2 : i1 to i32
    %c0_i32_1 = arith.constant 0 : i32
    %4 = arith.cmpi ne, %3, %c0_i32_1 : i32
    scf.if %4 {
      %cst_22 = arith.constant -1.000000e+30 : f32
      %32 = vector.broadcast %cst_22 : f32 to vector<128x128xf32>
      %c0_23 = arith.constant 0 : index
      %c0_24 = arith.constant 0 : index
      %33 = vector.load %arg9[%c0_23, %c0_24] : memref<128x128xf32, #tpu.memory_space<vmem>>, vector<128x128xf32>
      tpu.vector_store %arg9[%c0_23, %c0_24], %32 {strides = array<i32>} : memref<128x128xf32, #tpu.memory_space<vmem>>, vector<128x128xf32>,
      %cst_25 = arith.constant 0.000000e+00 : f32
      %34 = vector.broadcast %cst_25 : f32 to vector<128x128xf32>
      %c0_26 = arith.constant 0 : index
      %c0_27 = arith.constant 0 : index
      %35 = vector.load %arg10[%c0_26, %c0_27] : memref<128x128xf32, #tpu.memory_space<vmem>>, vector<128x128xf32>
      tpu.vector_store %arg10[%c0_26, %c0_27], %34 {strides = array<i32>} : memref<128x128xf32, #tpu.memory_space<vmem>>, vector<128x128xf32>,
      %cst_28 = arith.constant 0.000000e+00 : f32
      %36 = vector.broadcast %cst_28 : f32 to vector<128x128xf32>
      %c0_29 = arith.constant 0 : index
      %c0_30 = arith.constant 0 : index
      %37 = vector.load %arg11[%c0_29, %c0_30] : memref<128x128xf32, #tpu.memory_space<vmem>>, vector<128x128xf32>
      tpu.vector_store %arg11[%c0_29, %c0_30], %36 {strides = array<i32>} : memref<128x128xf32, #tpu.memory_space<vmem>>, vector<128x128xf32>,
      %cst_31 = arith.constant 0.000000e+00 : f32
      %38 = vector.broadcast %cst_31 : f32 to vector<128x128xf32>
      %c0_32 = arith.constant 0 : index
      %c0_33 = arith.constant 0 : index
      %39 = vector.load %arg12[%c0_32, %c0_33] : memref<128x128xf32, #tpu.memory_space<vmem>>, vector<128x128xf32>
      tpu.vector_store %arg12[%c0_32, %c0_33], %38 {strides = array<i32>} : memref<128x128xf32, #tpu.memory_space<vmem>>, vector<128x128xf32>,
      %cst_34 = arith.constant 0.000000e+00 : f32
      %40 = vector.broadcast %cst_34 : f32 to vector<128x128xf32>
      %c0_35 = arith.constant 0 : index
      %c0_36 = arith.constant 0 : index
      %41 = vector.load %arg13[%c0_35, %c0_36] : memref<128x128xf32, #tpu.memory_space<vmem>>, vector<128x128xf32>
      tpu.vector_store %arg13[%c0_35, %c0_36], %40 {strides = array<i32>} : memref<128x128xf32, #tpu.memory_space<vmem>>, vector<128x128xf32>,
    } else {
    }
    %c0 = arith.constant 0 : index
    %c0_2 = arith.constant 0 : index
    %5 = vector.load %arg2[%c0, %c0_2] : memref<128x64xf32, #tpu.memory_space<vmem>>, vector<128x64xf32>
    %c0_3 = arith.constant 0 : index
    %c0_4 = arith.constant 0 : index
    %6 = vector.load %arg3[%c0_3, %c0_4] : memref<64x128xf32, #tpu.memory_space<vmem>>, vector<64x128xf32>
    %cst = arith.constant dense<0.000000e+00> : vector<128x128xf32>
    %7 = tpu.matmul %5, %6, %cst {dimension_numbers = #tpu.dot_dimension_numbers<[1], [0], [0], [1], [0, 0, 1, 1], [], []>} : vector<128x64xf32>, vector<64x128xf32>, vector<128x128xf32> -> vector<128x128xf32>
    %cst_5 = arith.constant 14.2857141 : f32
    %8 = vector.broadcast %cst_5 : f32 to vector<128x128xf32>
    %9 = arith.mulf %7, %8 : vector<128x128xf32>
    %c0_6 = arith.constant 0 : index
    %c0_7 = arith.constant 0 : index
    %10 = vector.load %arg4[%c0_6, %c0_7] : memref<128x6xf32, #tpu.memory_space<vmem>>, vector<128x6xf32>
    %c0_8 = arith.constant 0 : index
    %c0_9 = arith.constant 0 : index
    %11 = vector.load %arg5[%c0_8, %c0_9] : memref<6x128xf32, #tpu.memory_space<vmem>>, vector<6x128xf32>
    %cst_10 = arith.constant dense<0.000000e+00> : vector<128x128xf32>
    %12 = tpu.matmul %10, %11, %cst_10 {dimension_numbers = #tpu.dot_dimension_numbers<[1], [0], [0], [1], [0, 0, 1, 1], [], []>} : vector<128x6xf32>, vector<6x128xf32>, vector<128x128xf32> -> vector<128x128xf32>
    %c0_11 = arith.constant 0 : index
    %c0_12 = arith.constant 0 : index
    %13 = vector.load %arg6[%c0_11, %c0_12] : memref<128x1xf32, #tpu.memory_space<vmem>>, vector<128x1xf32>
    %14 = vector.shape_cast %13 : vector<128x1xf32> to vector<128x1xf32>
    %15 = vector.broadcast %14 : vector<128x1xf32> to vector<128x128xf32>
    %c0_13 = arith.constant 0 : index
    %c0_14 = arith.constant 0 : index
    %16 = vector.load %arg7[%c0_13, %c0_14] : memref<1x128xf32, #tpu.memory_space<vmem>>, vector<1x128xf32>
    %c128_i32_15 = arith.constant 128 : i32
    %17 = arith.addi %1, %c128_i32_15 : i32
    %18 = arith.cmpi slt, %0, %17 : i32
    %c128_i32_16 = arith.constant 128 : i32
    %19 = arith.addi %0, %c128_i32_16 : i32
    %20 = arith.cmpi slt, %1, %19 : i32
    %21 = arith.andi %18, %20 : i1
    %c0_i32_17 = arith.constant 0 : i32
    %22 = arith.cmpi eq, %arg1, %c0_i32_17 : i32
    %23 = arith.ori %21, %22 : i1
    %24 = arith.extui %23 : i1 to i32
    %c0_i32_18 = arith.constant 0 : i32
    %25 = arith.cmpi ne, %24, %c0_i32_18 : i32
    scf.if %25 {
      %c0_i32_22 = arith.constant 0 : i32
      %32 = arith.addi %1, %c0_i32_22 : i32
      %33 = tpu.iota {dimensions = array<i32: 1>} : vector<128x128xi32>
      %34 = vector.broadcast %32 : i32 to vector<128x128xi32>
      %35 = arith.addi %34, %33 : vector<128x128xi32>
      %c8_i32 = arith.constant 8 : i32
      %36 = vector.broadcast %c8_i32 : i32 to vector<128x128xi32>
      %37 = arith.cmpi slt, %35, %36 : vector<128x128xi32>
      %cst_23 = arith.constant -1.000000e+30 : f32
      %38 = vector.broadcast %cst_23 : f32 to vector<128x128xf32>
      %39 = arith.select %37, %9, %38 : vector<128x128xi1>, vector<128x128xf32>
      %c0_24 = arith.constant 0 : index
      %c0_25 = arith.constant 0 : index
      %40 = vector.load %arg9[%c0_24, %c0_25] : memref<128x128xf32, #tpu.memory_space<vmem>>, vector<128x128xf32>
      %41 = arith.maximumf %40, %39 : vector<128x128xf32>
      %42 = arith.subf %40, %41 : vector<128x128xf32>
      %43 = math.exp %42 : vector<128x128xf32>
      %cst_26 = arith.constant 0.000000e+00 : f32
      %44 = vector.broadcast %cst_26 : f32 to vector<128x128xf32>
      %cst_27 = arith.constant 0.000000e+00 : f32
      %45 = vector.broadcast %cst_27 : f32 to vector<128x128xf32>
      %cst_28 = arith.constant 0.000000e+00 : f32
      %46 = vector.broadcast %cst_28 : f32 to vector<128x128xf32>
      %cst_29 = arith.constant 0.000000e+00 : f32
      %47 = vector.broadcast %cst_29 : f32 to vector<128x128xf32>
      %48 = tpu.iota {dimensions = array<i32: 0>} : vector<128x128xi32>
      %49 = vector.broadcast %0 : i32 to vector<128x128xi32>
      %50 = arith.addi %49, %48 : vector<128x128xi32>
      %51 = vector.broadcast %16 : vector<1x128xf32> to vector<128x128xf32>
      %52 = arith.addf %15, %51 : vector<128x128xf32>
      %53 = arith.subf %52, %12 : vector<128x128xf32>
      %cst_30 = arith.constant 9.99999993E-9 : f32
      %54 = vector.broadcast %cst_30 : f32 to vector<128x128xf32>
      %55 = arith.addf %53, %54 : vector<128x128xf32>
      %cst_31 = arith.constant 3.000000e-01 : f32
      %56 = vector.broadcast %cst_31 : f32 to vector<128x128xf32>
      %57 = arith.mulf %56, %55 : vector<128x128xf32>
      %58 = arith.cmpf oge, %12, %57 : vector<128x128xf32>
      %59 = arith.subf %9, %41 : vector<128x128xf32>
      %60 = math.exp %59 : vector<128x128xf32>
      %c0_i32_32 = arith.constant 0 : i32
      %61 = arith.addi %1, %c0_i32_32 : i32
      %62 = tpu.iota {dimensions = array<i32: 1>} : vector<128x128xi32>
      %63 = vector.broadcast %61 : i32 to vector<128x128xi32>
      %64 = arith.addi %63, %62 : vector<128x128xi32>
      %65 = arith.cmpi ne, %50, %64 : vector<128x128xi32>
      %c8_i32_33 = arith.constant 8 : i32
      %66 = vector.broadcast %c8_i32_33 : i32 to vector<128x128xi32>
      %67 = arith.cmpi slt, %64, %66 : vector<128x128xi32>
      %68 = arith.andi %65, %67 : vector<128x128xi1>
      %69 = arith.andi %58, %68 : vector<128x128xi1>
      %cst_34 = arith.constant 0.000000e+00 : f32
      %70 = vector.broadcast %cst_34 : f32 to vector<128x128xf32>
      %71 = arith.select %68, %60, %70 : vector<128x128xi1>, vector<128x128xf32>
      %72 = arith.extui %69 : vector<128x128xi1> to vector<128x128xi32>
      %73 = arith.sitofp %72 : vector<128x128xi32> to vector<128x128xf32>
      %74 = arith.mulf %73, %12 : vector<128x128xf32>
      %75 = tpu.reciprocal %55 {approx = true} : vector<128x128xf32> -> vector<128x128xf32>
      %76 = arith.mulf %74, %75 : vector<128x128xf32>
      %cst_35 = arith.constant 3.33333325 : f32
      %77 = vector.broadcast %cst_35 : f32 to vector<128x128xf32>
      %78 = arith.mulf %76, %77 : vector<128x128xf32>
      %79 = arith.addf %44, %71 : vector<128x128xf32>
      %80 = arith.addf %47, %73 : vector<128x128xf32>
      %81 = arith.addf %46, %78 : vector<128x128xf32>
      %82 = arith.mulf %78, %9 : vector<128x128xf32>
      %83 = arith.addf %45, %82 : vector<128x128xf32>
      %c0_36 = arith.constant 0 : index
      %c0_37 = arith.constant 0 : index
      %84 = vector.load %arg9[%c0_36, %c0_37] : memref<128x128xf32, #tpu.memory_space<vmem>>, vector<128x128xf32>
      tpu.vector_store %arg9[%c0_36, %c0_37], %41 {strides = array<i32>} : memref<128x128xf32, #tpu.memory_space<vmem>>, vector<128x128xf32>,
      %c0_38 = arith.constant 0 : index
      %c0_39 = arith.constant 0 : index
      %85 = vector.load %arg10[%c0_38, %c0_39] : memref<128x128xf32, #tpu.memory_space<vmem>>, vector<128x128xf32>
      %86 = arith.mulf %85, %43 : vector<128x128xf32>
      %87 = arith.addf %86, %79 : vector<128x128xf32>
      %c0_40 = arith.constant 0 : index
      %c0_41 = arith.constant 0 : index
      %88 = vector.load %arg10[%c0_40, %c0_41] : memref<128x128xf32, #tpu.memory_space<vmem>>, vector<128x128xf32>
      tpu.vector_store %arg10[%c0_40, %c0_41], %87 {strides = array<i32>} : memref<128x128xf32, #tpu.memory_space<vmem>>, vector<128x128xf32>,
      %c0_42 = arith.constant 0 : index
      %c0_43 = arith.constant 0 : index
      %89 = vector.load %arg11[%c0_42, %c0_43] : memref<128x128xf32, #tpu.memory_space<vmem>>, vector<128x128xf32>
      %90 = arith.addf %89, %83 : vector<128x128xf32>
      %c0_44 = arith.constant 0 : index
      %c0_45 = arith.constant 0 : index
      %91 = vector.load %arg11[%c0_44, %c0_45] : memref<128x128xf32, #tpu.memory_space<vmem>>, vector<128x128xf32>
      tpu.vector_store %arg11[%c0_44, %c0_45], %90 {strides = array<i32>} : memref<128x128xf32, #tpu.memory_space<vmem>>, vector<128x128xf32>,
      %c0_46 = arith.constant 0 : index
      %c0_47 = arith.constant 0 : index
      %92 = vector.load %arg12[%c0_46, %c0_47] : memref<128x128xf32, #tpu.memory_space<vmem>>, vector<128x128xf32>
      %93 = arith.addf %92, %81 : vector<128x128xf32>
      %c0_48 = arith.constant 0 : index
      %c0_49 = arith.constant 0 : index
      %94 = vector.load %arg12[%c0_48, %c0_49] : memref<128x128xf32, #tpu.memory_space<vmem>>, vector<128x128xf32>
      tpu.vector_store %arg12[%c0_48, %c0_49], %93 {strides = array<i32>} : memref<128x128xf32, #tpu.memory_space<vmem>>, vector<128x128xf32>,
      %c0_50 = arith.constant 0 : index
      %c0_51 = arith.constant 0 : index
      %95 = vector.load %arg13[%c0_50, %c0_51] : memref<128x128xf32, #tpu.memory_space<vmem>>, vector<128x128xf32>
      %96 = arith.addf %95, %80 : vector<128x128xf32>
      %c0_52 = arith.constant 0 : index
      %c0_53 = arith.constant 0 : index
      %97 = vector.load %arg13[%c0_52, %c0_53] : memref<128x128xf32, #tpu.memory_space<vmem>>, vector<128x128xf32>
      tpu.vector_store %arg13[%c0_52, %c0_53], %96 {strides = array<i32>} : memref<128x128xf32, #tpu.memory_space<vmem>>, vector<128x128xf32>,
    } else {
    }
    %true = arith.constant true
    %26 = arith.xori %23, %true : i1
    %27 = arith.extui %26 : i1 to i32
    %c0_i32_19 = arith.constant 0 : i32
    %28 = arith.cmpi ne, %27, %c0_i32_19 : i32
    scf.if %28 {
      %c0_22 = arith.constant 0 : index
      %c0_23 = arith.constant 0 : index
      %32 = vector.load %arg9[%c0_22, %c0_23] : memref<128x128xf32, #tpu.memory_space<vmem>>, vector<128x128xf32>
      %33 = arith.maximumf %32, %9 : vector<128x128xf32>
      %34 = arith.subf %32, %33 : vector<128x128xf32>
      %35 = math.exp %34 : vector<128x128xf32>
      %cst_24 = arith.constant 0.000000e+00 : f32
      %36 = vector.broadcast %cst_24 : f32 to vector<128x128xf32>
      %cst_25 = arith.constant 0.000000e+00 : f32
      %37 = vector.broadcast %cst_25 : f32 to vector<128x128xf32>
      %cst_26 = arith.constant 0.000000e+00 : f32
      %38 = vector.broadcast %cst_26 : f32 to vector<128x128xf32>
      %cst_27 = arith.constant 0.000000e+00 : f32
      %39 = vector.broadcast %cst_27 : f32 to vector<128x128xf32>
      %40 = vector.broadcast %16 : vector<1x128xf32> to vector<128x128xf32>
      %41 = arith.addf %15, %40 : vector<128x128xf32>
      %42 = arith.subf %41, %12 : vector<128x128xf32>
      %cst_28 = arith.constant 9.99999993E-9 : f32
      %43 = vector.broadcast %cst_28 : f32 to vector<128x128xf32>
      %44 = arith.addf %42, %43 : vector<128x128xf32>
      %cst_29 = arith.constant 3.000000e-01 : f32
      %45 = vector.broadcast %cst_29 : f32 to vector<128x128xf32>
      %46 = arith.mulf %45, %44 : vector<128x128xf32>
      %47 = arith.cmpf oge, %12, %46 : vector<128x128xf32>
      %48 = arith.subf %9, %33 : vector<128x128xf32>
      %49 = math.exp %48 : vector<128x128xf32>
      %50 = arith.extui %47 : vector<128x128xi1> to vector<128x128xi32>
      %51 = arith.sitofp %50 : vector<128x128xi32> to vector<128x128xf32>
      %52 = arith.mulf %51, %12 : vector<128x128xf32>
      %53 = tpu.reciprocal %44 {approx = true} : vector<128x128xf32> -> vector<128x128xf32>
      %54 = arith.mulf %52, %53 : vector<128x128xf32>
      %cst_30 = arith.constant 3.33333325 : f32
      %55 = vector.broadcast %cst_30 : f32 to vector<128x128xf32>
      %56 = arith.mulf %54, %55 : vector<128x128xf32>
      %57 = arith.addf %36, %49 : vector<128x128xf32>
      %58 = arith.addf %39, %51 : vector<128x128xf32>
      %59 = arith.addf %38, %56 : vector<128x128xf32>
      %60 = arith.mulf %56, %9 : vector<128x128xf32>
      %61 = arith.addf %37, %60 : vector<128x128xf32>
      %c0_31 = arith.constant 0 : index
      %c0_32 = arith.constant 0 : index
      %62 = vector.load %arg9[%c0_31, %c0_32] : memref<128x128xf32, #tpu.memory_space<vmem>>, vector<128x128xf32>
      tpu.vector_store %arg9[%c0_31, %c0_32], %33 {strides = array<i32>} : memref<128x128xf32, #tpu.memory_space<vmem>>, vector<128x128xf32>,
      %c0_33 = arith.constant 0 : index
      %c0_34 = arith.constant 0 : index
      %63 = vector.load %arg10[%c0_33, %c0_34] : memref<128x128xf32, #tpu.memory_space<vmem>>, vector<128x128xf32>
      %64 = arith.mulf %63, %35 : vector<128x128xf32>
      %65 = arith.addf %64, %57 : vector<128x128xf32>
      %c0_35 = arith.constant 0 : index
      %c0_36 = arith.constant 0 : index
      %66 = vector.load %arg10[%c0_35, %c0_36] : memref<128x128xf32, #tpu.memory_space<vmem>>, vector<128x128xf32>
      tpu.vector_store %arg10[%c0_35, %c0_36], %65 {strides = array<i32>} : memref<128x128xf32, #tpu.memory_space<vmem>>, vector<128x128xf32>,
      %c0_37 = arith.constant 0 : index
      %c0_38 = arith.constant 0 : index
      %67 = vector.load %arg11[%c0_37, %c0_38] : memref<128x128xf32, #tpu.memory_space<vmem>>, vector<128x128xf32>
      %68 = arith.addf %67, %61 : vector<128x128xf32>
      %c0_39 = arith.constant 0 : index
      %c0_40 = arith.constant 0 : index
      %69 = vector.load %arg11[%c0_39, %c0_40] : memref<128x128xf32, #tpu.memory_space<vmem>>, vector<128x128xf32>
      tpu.vector_store %arg11[%c0_39, %c0_40], %68 {strides = array<i32>} : memref<128x128xf32, #tpu.memory_space<vmem>>, vector<128x128xf32>,
      %c0_41 = arith.constant 0 : index
      %c0_42 = arith.constant 0 : index
      %70 = vector.load %arg12[%c0_41, %c0_42] : memref<128x128xf32, #tpu.memory_space<vmem>>, vector<128x128xf32>
      %71 = arith.addf %70, %59 : vector<128x128xf32>
      %c0_43 = arith.constant 0 : index
      %c0_44 = arith.constant 0 : index
      %72 = vector.load %arg12[%c0_43, %c0_44] : memref<128x128xf32, #tpu.memory_space<vmem>>, vector<128x128xf32>
      tpu.vector_store %arg12[%c0_43, %c0_44], %71 {strides = array<i32>} : memref<128x128xf32, #tpu.memory_space<vmem>>, vector<128x128xf32>,
      %c0_45 = arith.constant 0 : index
      %c0_46 = arith.constant 0 : index
      %73 = vector.load %arg13[%c0_45, %c0_46] : memref<128x128xf32, #tpu.memory_space<vmem>>, vector<128x128xf32>
      %74 = arith.addf %73, %58 : vector<128x128xf32>
      %c0_47 = arith.constant 0 : index
      %c0_48 = arith.constant 0 : index
      %75 = vector.load %arg13[%c0_47, %c0_48] : memref<128x128xf32, #tpu.memory_space<vmem>>, vector<128x128xf32>
      tpu.vector_store %arg13[%c0_47, %c0_48], %74 {strides = array<i32>} : memref<128x128xf32, #tpu.memory_space<vmem>>, vector<128x128xf32>,
    } else {
    }
    %c0_i32_20 = arith.constant 0 : i32
    %29 = arith.cmpi eq, %arg1, %c0_i32_20 : i32
    %30 = arith.extui %29 : i1 to i32
    %c0_i32_21 = arith.constant 0 : i32
    %31 = arith.cmpi ne, %30, %c0_i32_21 : i32
    scf.if %31 {
      %c0_22 = arith.constant 0 : index
      %c0_23 = arith.constant 0 : index
      %32 = vector.load %arg9[%c0_22, %c0_23] : memref<128x128xf32, #tpu.memory_space<vmem>>, vector<128x128xf32>
      %cst_24 = arith.constant dense<0xFF800000> : vector<128xf32>
      %33 = vector.multi_reduction <maximumf>, %32, %cst_24 [1] : vector<128x128xf32> to vector<128xf32>
      %34 = vector.shape_cast %33 : vector<128xf32> to vector<128x1xf32>
      %c0_25 = arith.constant 0 : index
      %c0_26 = arith.constant 0 : index
      %35 = vector.load %arg10[%c0_25, %c0_26] : memref<128x128xf32, #tpu.memory_space<vmem>>, vector<128x128xf32>
      %36 = vector.broadcast %34 : vector<128x1xf32> to vector<128x128xf32>
      %37 = arith.subf %32, %36 : vector<128x128xf32>
      %38 = math.exp %37 : vector<128x128xf32>
      %39 = arith.mulf %35, %38 : vector<128x128xf32>
      %cst_27 = arith.constant dense<0.000000e+00> : vector<128xf32>
      %40 = vector.multi_reduction <add>, %39, %cst_27 [1] : vector<128x128xf32> to vector<128xf32>
      %41 = vector.shape_cast %40 : vector<128xf32> to vector<128x1xf32>
      %c0_28 = arith.constant 0 : index
      %c0_29 = arith.constant 0 : index
      %42 = vector.load %arg11[%c0_28, %c0_29] : memref<128x128xf32, #tpu.memory_space<vmem>>, vector<128x128xf32>
      %cst_30 = arith.constant dense<0.000000e+00> : vector<128xf32>
      %43 = vector.multi_reduction <add>, %42, %cst_30 [1] : vector<128x128xf32> to vector<128xf32>
      %44 = vector.shape_cast %43 : vector<128xf32> to vector<128x1xf32>
      %c0_31 = arith.constant 0 : index
      %c0_32 = arith.constant 0 : index
      %45 = vector.load %arg12[%c0_31, %c0_32] : memref<128x128xf32, #tpu.memory_space<vmem>>, vector<128x128xf32>
      %cst_33 = arith.constant dense<0.000000e+00> : vector<128xf32>
      %46 = vector.multi_reduction <add>, %45, %cst_33 [1] : vector<128x128xf32> to vector<128xf32>
      %47 = vector.shape_cast %46 : vector<128xf32> to vector<128x1xf32>
      %c0_34 = arith.constant 0 : index
      %c0_35 = arith.constant 0 : index
      %48 = vector.load %arg13[%c0_34, %c0_35] : memref<128x128xf32, #tpu.memory_space<vmem>>, vector<128x128xf32>
      %cst_36 = arith.constant dense<0.000000e+00> : vector<128xf32>
      %49 = vector.multi_reduction <add>, %48, %cst_36 [1] : vector<128x128xf32> to vector<128xf32>
      %50 = vector.shape_cast %49 : vector<128xf32> to vector<128x1xf32>
      %cst_37 = arith.constant 9.99999993E-9 : f32
      %51 = vector.broadcast %cst_37 : f32 to vector<128x1xf32>
      %52 = arith.addf %41, %51 : vector<128x1xf32>
      %53 = math.log %52 : vector<128x1xf32>
      %54 = arith.addf %34, %53 : vector<128x1xf32>
      %55 = arith.mulf %54, %47 : vector<128x1xf32>
      %56 = arith.subf %44, %55 : vector<128x1xf32>
      %cst_38 = arith.constant 9.99999993E-9 : f32
      %57 = vector.broadcast %cst_38 : f32 to vector<128x1xf32>
      %58 = arith.addf %50, %57 : vector<128x1xf32>
      %59 = arith.divf %56, %58 : vector<128x1xf32>
      %c0_39 = arith.constant 0 : index
      %c0_40 = arith.constant 0 : index
      %60 = vector.load %arg8[%c0_39, %c0_40] : memref<128x1xf32, #tpu.memory_space<vmem>>, vector<128x1xf32>
      tpu.vector_store %arg8[%c0_39, %c0_40], %59 {strides = array<i32>} : memref<128x1xf32, #tpu.memory_space<vmem>>, vector<128x1xf32>,
    } else {
    }
    return
  }
  func.func @transform_0(%arg0: i32, %arg1: i32) -> (i32, i32) {
    %c0_i32 = arith.constant 0 : i32
    %c0_i32_0 = arith.constant 0 : i32
    return %arg0, %c0_i32 : i32, i32
  }
  func.func @transform_1(%arg0: i32, %arg1: i32) -> (i32, i32) {
    %c0_i32 = arith.constant 0 : i32
    %c0_i32_0 = arith.constant 0 : i32
    return %c0_i32, %arg1 : i32, i32
  }
  func.func @transform_2(%arg0: i32, %arg1: i32) -> (i32, i32) {
    %c0_i32 = arith.constant 0 : i32
    %c0_i32_0 = arith.constant 0 : i32
    return %arg0, %c0_i32 : i32, i32
  }
  func.func @transform_3(%arg0: i32, %arg1: i32) -> (i32, i32) {
    %c0_i32 = arith.constant 0 : i32
    %c0_i32_0 = arith.constant 0 : i32
    return %c0_i32, %arg1 : i32, i32
  }
  func.func @transform_4(%arg0: i32, %arg1: i32) -> (i32, i32) {
    %c0_i32 = arith.constant 0 : i32
    %c0_i32_0 = arith.constant 0 : i32
    return %arg0, %c0_i32 : i32, i32
  }
  func.func @transform_5(%arg0: i32, %arg1: i32) -> (i32, i32) {
    %c0_i32 = arith.constant 0 : i32
    %c0_i32_0 = arith.constant 0 : i32
    return %c0_i32, %arg1 : i32, i32
  }
  func.func @transform_6(%arg0: i32, %arg1: i32) -> (i32, i32) {
    %c0_i32 = arith.constant 0 : i32
    %c0_i32_0 = arith.constant 0 : i32
    return %arg0, %c0_i32 : i32, i32
  }
}

</mosaic_0001>

<llo_original>
// kernel: tpu_custom_call.1
$region0: #{tpu_custom_call.1}
  #allocation0 [shape = 'u32[]', space=smem, size = 0x4, offset = 0x4, fixed_abs, tag = 'smem constant byte address 0x4 - core index']
  #allocation1 [shape = 'u32[72,128]{1,0:T(1,128)}', space=vmem, size = 0x9000, scoped, tag = 'internal scratch']
  #allocation2 [shape = 'f32[128,128]{1,0:T(8,128)}', space=vmem, size = 0x10000, scoped, tag = 'scratch operand']
  #allocation3 [shape = 'f32[128,128]{1,0:T(8,128)}', space=vmem, size = 0x10000, scoped, tag = 'scratch operand']
  #allocation4 [shape = 'f32[128,128]{1,0:T(8,128)}', space=vmem, size = 0x10000, scoped, tag = 'scratch operand']
  #allocation5 [shape = 'f32[128,128]{1,0:T(8,128)}', space=vmem, size = 0x10000, scoped, tag = 'scratch operand']
  #allocation6 [shape = 'f32[128,128]{1,0:T(8,128)}', space=vmem, size = 0x10000, scoped, tag = 'scratch operand']
  %s0 = inlined_call_operand.vmem [shape: f32[128,64], index: 0, kind: input, shape index: {}]
  %s1 = inlined_call_operand.vmem [shape: f32[64,128], index: 1, kind: input, shape index: {}]
  %s2 = inlined_call_operand.vmem [shape: f32[128,6], index: 2, kind: input, shape index: {}]
  %s3 = inlined_call_operand.vmem [shape: f32[6,128], index: 3, kind: input, shape index: {}]
  %s4 = inlined_call_operand.vmem [shape: f32[128,1], index: 4, kind: input, shape index: {}]
  %s5 = inlined_call_operand.vmem [shape: f32[1,128], index: 5, kind: input, shape index: {}]
  %s6 = inlined_call_operand.vmem [shape: f32[128,1], index: 6, kind: output, shape index: {}]
  %s7 = sld [smem:[#allocation0]]
  $region50: #{tpu_custom_call.1} parent=0
    _
  %s9 = ssub.s32 1, %s7
  %s10 = scalar_select 0, %s9, %s7
  // Predicated region
  $region2: #{tpu_custom_call.1} parent=0 // pred_check
    _
  $region3: #{tpu_custom_call.1} parent=0 // pred_check_branch
    %12 = sbr.rel (0) target = $region5
  $region4: #{tpu_custom_call.1} parent=0 // pred_region
    _
  $region5: #{tpu_custom_call.1} parent=0 // pred_fallthru
    _
  // Predicated region
  $region6: #{tpu_custom_call.1} parent=0 // pred_check
    _
  $region7: #{tpu_custom_call.1} parent=0 // pred_check_branch
    %14 = sbr.rel (0) target = $region9
  $region8: #{tpu_custom_call.1} parent=0 // pred_region
    _
  $region9: #{tpu_custom_call.1} parent=0 // pred_fallthru
    _
  // Predicated region
  $region10: #{tpu_custom_call.1} parent=0 // pred_check
    _
  $region11: #{tpu_custom_call.1} parent=0 // pred_check_branch
    %16 = sbr.rel (0) target = $region13
  $region12: #{tpu_custom_call.1} parent=0 // pred_region
    _
  $region13: #{tpu_custom_call.1} parent=0 // pred_fallthru
    _
  // Predicated region
  $region14: #{tpu_custom_call.1} parent=0 // pred_check
    _
  $region15: #{tpu_custom_call.1} parent=0 // pred_check_branch
    %18 = sbr.rel (0) target = $region17
  $region16: #{tpu_custom_call.1} parent=0 // pred_region
    _
  $region17: #{tpu_custom_call.1} parent=0 // pred_fallthru
    _
  // Predicated region
  $region18: #{tpu_custom_call.1} parent=0 // pred_check
    _
  $region19: #{tpu_custom_call.1} parent=0 // pred_check_branch
    %20 = sbr.rel (0) target = $region21
  $region20: #{tpu_custom_call.1} parent=0 // pred_region
    _
  $region21: #{tpu_custom_call.1} parent=0 // pred_fallthru
    _
  // Predicated region
  $region22: #{tpu_custom_call.1} parent=0 // pred_check
    _
  $region23: #{tpu_custom_call.1} parent=0 // pred_check_branch
    %22 = sbr.rel (0) target = $region25
  $region24: #{tpu_custom_call.1} parent=0 // pred_region
    _
  $region25: #{tpu_custom_call.1} parent=0 // pred_fallthru
    _
  %s23 = smul.u32 0, 128
  %s24 = smul.u32 0, 128
  %p25 = scmp.eq.s32.totalorder 0, 0
  // Predicated region
  $region26: #{tpu_custom_call.1} parent=0 // pred_check
    %p26 = pneg %p25
  $region27: #{tpu_custom_call.1} parent=0 // pred_check_branch
    %28 = sbr.rel (%p26) target = $region29
  $region28: #{tpu_custom_call.1} parent=0 // pred_region
    %29 = vst [vmem:[#allocation2] sm:$0xff] -1e+30
    %30 = vst [vmem:[#allocation2 + $0x8] sm:$0xff] -1e+30
    %31 = vst [vmem:[#allocation2 + $0x10] sm:$0xff] -1e+30
    %32 = vst [vmem:[#allocation2 + $0x18] sm:$0xff] -1e+30
    %33 = vst [vmem:[#allocation2 + $0x20] sm:$0xff] -1e+30
    %34 = vst [vmem:[#allocation2 + $0x28] sm:$0xff] -1e+30
    %35 = vst [vmem:[#allocation2 + $0x30] sm:$0xff] -1e+30
    %36 = vst [vmem:[#allocation2 + $0x38] sm:$0xff] -1e+30
    %37 = vst [vmem:[#allocation2 + $0x40] sm:$0xff] -1e+30
    %38 = vst [vmem:[#allocation2 + $0x48] sm:$0xff] -1e+30
    %39 = vst [vmem:[#allocation2 + $0x50] sm:$0xff] -1e+30
    %40 = vst [vmem:[#allocation2 + $0x58] sm:$0xff] -1e+30
    %41 = vst [vmem:[#allocation2 + $0x60] sm:$0xff] -1e+30
    %42 = vst [vmem:[#allocation2 + $0x68] sm:$0xff] -1e+30
    %43 = vst [vmem:[#allocation2 + $0x70] sm:$0xff] -1e+30
    %44 = vst [vmem:[#allocation2 + $0x78] sm:$0xff] -1e+30
    %45 = vst [vmem:[#allocation3] sm:$0xff] 0.0
    %46 = vst [vmem:[#allocation3 + $0x8] sm:$0xff] 0.0
    %47 = vst [vmem:[#allocation3 + $0x10] sm:$0xff] 0.0
    %48 = vst [vmem:[#allocation3 + $0x18] sm:$0xff] 0.0
    %49 = vst [vmem:[#allocation3 + $0x20] sm:$0xff] 0.0
    %50 = vst [vmem:[#allocation3 + $0x28] sm:$0xff] 0.0
    %51 = vst [vmem:[#allocation3 + $0x30] sm:$0xff] 0.0
    %52 = vst [vmem:[#allocation3 + $0x38] sm:$0xff] 0.0
    %53 = vst [vmem:[#allocation3 + $0x40] sm:$0xff] 0.0
    %54 = vst [vmem:[#allocation3 + $0x48] sm:$0xff] 0.0
    %55 = vst [vmem:[#allocation3 + $0x50] sm:$0xff] 0.0
    %56 = vst [vmem:[#allocation3 + $0x58] sm:$0xff] 0.0
    %57 = vst [vmem:[#allocation3 + $0x60] sm:$0xff] 0.0
    %58 = vst [vmem:[#allocation3 + $0x68] sm:$0xff] 0.0
    %59 = vst [vmem:[#allocation3 + $0x70] sm:$0xff] 0.0
    %60 = vst [vmem:[#allocation3 + $0x78] sm:$0xff] 0.0
    %61 = vst [vmem:[#allocation4] sm:$0xff] 0.0
    %62 = vst [vmem:[#allocation4 + $0x8] sm:$0xff] 0.0
    %63 = vst [vmem:[#allocation4 + $0x10] sm:$0xff] 0.0
    %64 = vst [vmem:[#allocation4 + $0x18] sm:$0xff] 0.0
    %65 = vst [vmem:[#allocation4 + $0x20] sm:$0xff] 0.0
    %66 = vst [vmem:[#allocation4 + $0x28] sm:$0xff] 0.0
    %67 = vst [vmem:[#allocation4 + $0x30] sm:$0xff] 0.0
    %68 = vst [vmem:[#allocation4 + $0x38] sm:$0xff] 0.0
    %69 = vst [vmem:[#allocation4 + $0x40] sm:$0xff] 0.0
    %70 = vst [vmem:[#allocation4 + $0x48] sm:$0xff] 0.0
    %71 = vst [vmem:[#allocation4 + $0x50] sm:$0xff] 0.0
    %72 = vst [vmem:[#allocation4 + $0x58] sm:$0xff] 0.0
    %73 = vst [vmem:[#allocation4 + $0x60] sm:$0xff] 0.0
    %74 = vst [vmem:[#allocation4 + $0x68] sm:$0xff] 0.0
    %75 = vst [vmem:[#allocation4 + $0x70] sm:$0xff] 0.0
    %76 = vst [vmem:[#allocation4 + $0x78] sm:$0xff] 0.0
    %77 = vst [vmem:[#allocation5] sm:$0xff] 0.0
    %78 = vst [vmem:[#allocation5 + $0x8] sm:$0xff] 0.0
    %79 = vst [vmem:[#allocation5 + $0x10] sm:$0xff] 0.0
    %80 = vst [vmem:[#allocation5 + $0x18] sm:$0xff] 0.0
    %81 = vst [vmem:[#allocation5 + $0x20] sm:$0xff] 0.0
    %82 = vst [vmem:[#allocation5 + $0x28] sm:$0xff] 0.0
    %83 = vst [vmem:[#allocation5 + $0x30] sm:$0xff] 0.0
    %84 = vst [vmem:[#allocation5 + $0x38] sm:$0xff] 0.0
    %85 = vst [vmem:[#allocation5 + $0x40] sm:$0xff] 0.0
    %86 = vst [vmem:[#allocation5 + $0x48] sm:$0xff] 0.0
    %87 = vst [vmem:[#allocation5 + $0x50] sm:$0xff] 0.0
    %88 = vst [vmem:[#allocation5 + $0x58] sm:$0xff] 0.0
    %89 = vst [vmem:[#allocation5 + $0x60] sm:$0xff] 0.0
    %90 = vst [vmem:[#allocation5 + $0x68] sm:$0xff] 0.0
    %91 = vst [vmem:[#allocation5 + $0x70] sm:$0xff] 0.0
    %92 = vst [vmem:[#allocation5 + $0x78] sm:$0xff] 0.0
    %93 = vst [vmem:[#allocation6] sm:$0xff] 0.0
    %94 = vst [vmem:[#allocation6 + $0x8] sm:$0xff] 0.0
    %95 = vst [vmem:[#allocation6 + $0x10] sm:$0xff] 0.0
    %96 = vst [vmem:[#allocation6 + $0x18] sm:$0xff] 0.0
    %97 = vst [vmem:[#allocation6 + $0x20] sm:$0xff] 0.0
    %98 = vst [vmem:[#allocation6 + $0x28] sm:$0xff] 0.0
    %99 = vst [vmem:[#allocation6 + $0x30] sm:$0xff] 0.0
    %100 = vst [vmem:[#allocation6 + $0x38] sm:$0xff] 0.0
    %101 = vst [vmem:[#allocation6 + $0x40] sm:$0xff] 0.0
    %102 = vst [vmem:[#allocation6 + $0x48] sm:$0xff] 0.0
    %103 = vst [vmem:[#allocation6 + $0x50] sm:$0xff] 0.0
    %104 = vst [vmem:[#allocation6 + $0x58] sm:$0xff] 0.0
    %105 = vst [vmem:[#allocation6 + $0x60] sm:$0xff] 0.0
    %106 = vst [vmem:[#allocation6 + $0x68] sm:$0xff] 0.0
    %107 = vst [vmem:[#allocation6 + $0x70] sm:$0xff] 0.0
    %108 = vst [vmem:[#allocation6 + $0x78] sm:$0xff] 0.0
  $region29: #{tpu_custom_call.1} parent=0 // pred_fallthru
    _
  %v109 = vld [vmem:[%s0] sm:$0xff]
  %v110 = vld [vmem:[%s0 + $0x8] sm:$0xff]
  %v111 = vld [vmem:[%s0 + $0x10] sm:$0xff]
  %v112 = vld [vmem:[%s0 + $0x18] sm:$0xff]
  %v113 = vld [vmem:[%s0 + $0x20] sm:$0xff]
  %v114 = vld [vmem:[%s0 + $0x28] sm:$0xff]
  %v115 = vld [vmem:[%s0 + $0x30] sm:$0xff]
  %v116 = vld [vmem:[%s0 + $0x38] sm:$0xff]
  %v117 = vld [vmem:[%s0 + $0x40] sm:$0xff]
  %v118 = vld [vmem:[%s0 + $0x48] sm:$0xff]
  %v119 = vld [vmem:[%s0 + $0x50] sm:$0xff]
  %v120 = vld [vmem:[%s0 + $0x58] sm:$0xff]
  %v121 = vld [vmem:[%s0 + $0x60] sm:$0xff]
  %v122 = vld [vmem:[%s0 + $0x68] sm:$0xff]
  %v123 = vld [vmem:[%s0 + $0x70] sm:$0xff]
  %v124 = vld [vmem:[%s0 + $0x78] sm:$0xff]
  %v125 = vld [vmem:[%s1] sm:$0xff]
  %v126 = vld [vmem:[%s1 + $0x8] sm:$0xff]
  %v127 = vld [vmem:[%s1 + $0x10] sm:$0xff]
  %v128 = vld [vmem:[%s1 + $0x18] sm:$0xff]
  %v129 = vld [vmem:[%s1 + $0x20] sm:$0xff]
  %v130 = vld [vmem:[%s1 + $0x28] sm:$0xff]
  %v131 = vld [vmem:[%s1 + $0x30] sm:$0xff]
  %v132 = vld [vmem:[%s1 + $0x38] sm:$0xff]
  %vm133 = vcmask 523264
  %v135 = vsel %vm133, %v109, 0
  %v138 = vsel %vm133, %v110, 0
  %v141 = vsel %vm133, %v111, 0
  %v144 = vsel %vm133, %v112, 0
  %v147 = vsel %vm133, %v113, 0
  %v150 = vsel %vm133, %v114, 0
  %v153 = vsel %vm133, %v115, 0
  %v156 = vsel %vm133, %v116, 0
  %v159 = vsel %vm133, %v117, 0
  %v162 = vsel %vm133, %v118, 0
  %v165 = vsel %vm133, %v119, 0
  %v168 = vsel %vm133, %v120, 0
  %v171 = vsel %vm133, %v121, 0
  %v174 = vsel %vm133, %v122, 0
  %v177 = vsel %vm133, %v123, 0
  %v180 = vsel %vm133, %v124, 0
  %182 = vmatpush.msra.mxu0 0.0
  %183 = vmatpush.msra.mxu0 0.0
  %184 = vmatpush.msra.mxu0 0.0
  %185 = vmatpush.msra.mxu0 0.0
  %186 = vmatpush.msra.mxu0 0.0
  %187 = vmatpush.msra.mxu0 0.0
  %188 = vmatpush.msra.mxu0 0.0
  %189 = vmatpush.msra.mxu0 0.0
  %190 = vmatpush.msra.mxu0 %v132
  %191 = vmatpush.msra.mxu0 %v131
  %192 = vmatpush.msra.mxu0 %v130
  %193 = vmatpush.msra.mxu0 %v129
  %194 = vmatpush.msra.mxu0 %v128
  %195 = vmatpush.msra.mxu0 %v127
  %196 = vmatpush.msra.mxu0 %v126
  %197 = vmatpush.msra.mxu0 %v125
  %198 = vmatmul.f32.gmra.mxu0 %v135
  %v199 = vpop.f32.mrf.mxu0
  %v200 = vadd.f32 0.0, %v199
  %201 = vmatmul.f32.gmra.mxu0 %v138
  %v202 = vpop.f32.mrf.mxu0
  %v203 = vadd.f32 0.0, %v202
  %204 = vmatmul.f32.gmra.mxu0 %v141
  %v205 = vpop.f32.mrf.mxu0
  %v206 = vadd.f32 0.0, %v205
  %207 = vmatmul.f32.gmra.mxu0 %v144
  %v208 = vpop.f32.mrf.mxu0
  %v209 = vadd.f32 0.0, %v208
  %210 = vmatmul.f32.gmra.mxu0 %v147
  %v211 = vpop.f32.mrf.mxu0
  %v212 = vadd.f32 0.0, %v211
  %213 = vmatmul.f32.gmra.mxu0 %v150
  %v214 = vpop.f32.mrf.mxu0
  %v215 = vadd.f32 0.0, %v214
  %216 = vmatmul.f32.gmra.mxu0 %v153
  %v217 = vpop.f32.mrf.mxu0
  %v218 = vadd.f32 0.0, %v217
  %219 = vmatmul.f32.gmra.mxu0 %v156
  %v220 = vpop.f32.mrf.mxu0
  %v221 = vadd.f32 0.0, %v220
  %222 = vmatmul.f32.gmra.mxu0 %v159
  %v223 = vpop.f32.mrf.mxu0
  %v224 = vadd.f32 0.0, %v223
  %225 = vmatmul.f32.gmra.mxu0 %v162
  %v226 = vpop.f32.mrf.mxu0
  %v227 = vadd.f32 0.0, %v226
  %228 = vmatmul.f32.gmra.mxu0 %v165
  %v229 = vpop.f32.mrf.mxu0
  %v230 = vadd.f32 0.0, %v229
  %231 = vmatmul.f32.gmra.mxu0 %v168
  %v232 = vpop.f32.mrf.mxu0
  %v233 = vadd.f32 0.0, %v232
  %234 = vmatmul.f32.gmra.mxu0 %v171
  %v235 = vpop.f32.mrf.mxu0
  %v236 = vadd.f32 0.0, %v235
  %237 = vmatmul.f32.gmra.mxu0 %v174
  %v238 = vpop.f32.mrf.mxu0
  %v239 = vadd.f32 0.0, %v238
  %240 = vmatmul.f32.gmra.mxu0 %v177
  %v241 = vpop.f32.mrf.mxu0
  %v242 = vadd.f32 0.0, %v241
  %243 = vmatmul.f32.gmra.mxu0 %v180
  %v244 = vpop.f32.mrf.mxu0
  %v245 = vadd.f32 0.0, %v244
  %246 = vdwg.mxu0
  %v247 = vmul.f32 %v200, 14.285714
  %v248 = vmul.f32 %v203, 14.285714
  %v249 = vmul.f32 %v206, 14.285714
  %v250 = vmul.f32 %v209, 14.285714
  %v251 = vmul.f32 %v212, 14.285714
  %v252 = vmul.f32 %v215, 14.285714
  %v253 = vmul.f32 %v218, 14.285714
  %v254 = vmul.f32 %v221, 14.285714
  %v255 = vmul.f32 %v224, 14.285714
  %v256 = vmul.f32 %v227, 14.285714
  %v257 = vmul.f32 %v230, 14.285714
  %v258 = vmul.f32 %v233, 14.285714
  %v259 = vmul.f32 %v236, 14.285714
  %v260 = vmul.f32 %v239, 14.285714
  %v261 = vmul.f32 %v242, 14.285714
  %v262 = vmul.f32 %v245, 14.285714
  %v263 = vld [vmem:[%s2] sm:$0xff]
  %v264 = vld [vmem:[%s2 + $0x8] sm:$0xff]
  %v265 = vld [vmem:[%s2 + $0x10] sm:$0xff]
  %v266 = vld [vmem:[%s2 + $0x18] sm:$0xff]
  %v267 = vld [vmem:[%s2 + $0x20] sm:$0xff]
  %v268 = vld [vmem:[%s2 + $0x28] sm:$0xff]
  %v269 = vld [vmem:[%s2 + $0x30] sm:$0xff]
  %v270 = vld [vmem:[%s2 + $0x38] sm:$0xff]
  %v271 = vld [vmem:[%s2 + $0x40] sm:$0xff]
  %v272 = vld [vmem:[%s2 + $0x48] sm:$0xff]
  %v273 = vld [vmem:[%s2 + $0x50] sm:$0xff]
  %v274 = vld [vmem:[%s2 + $0x58] sm:$0xff]
  %v275 = vld [vmem:[%s2 + $0x60] sm:$0xff]
  %v276 = vld [vmem:[%s2 + $0x68] sm:$0xff]
  %v277 = vld [vmem:[%s2 + $0x70] sm:$0xff]
  %v278 = vld [vmem:[%s2 + $0x78] sm:$0xff]
  %v279 = vld [vmem:[%s3] sm:$0x3f]
  %vm280 = vcmask 48128
  %v282 = vsel %vm280, %v263, 0
  %v285 = vsel %vm280, %v264, 0
  %v288 = vsel %vm280, %v265, 0
  %v291 = vsel %vm280, %v266, 0
  %v294 = vsel %vm280, %v267, 0
  %v297 = vsel %vm280, %v268, 0
  %v300 = vsel %vm280, %v269, 0
  %v303 = vsel %vm280, %v270, 0
  %v306 = vsel %vm280, %v271, 0
  %v309 = vsel %vm280, %v272, 0
  %v312 = vsel %vm280, %v273, 0
  %v315 = vsel %vm280, %v274, 0
  %v318 = vsel %vm280, %v275, 0
  %v321 = vsel %vm280, %v276, 0
  %v324 = vsel %vm280, %v277, 0
  %v327 = vsel %vm280, %v278, 0
  %vm329 = vcmask 1045504
  %v331 = vsel %vm329, %v279, 0
  %333 = vmatpush.msra.mxu0 0.0
  %334 = vmatpush.msra.mxu0 0.0
  %335 = vmatpush.msra.mxu0 0.0
  %336 = vmatpush.msra.mxu0 0.0
  %337 = vmatpush.msra.mxu0 0.0
  %338 = vmatpush.msra.mxu0 0.0
  %339 = vmatpush.msra.mxu0 0.0
  %340 = vmatpush.msra.mxu0 0.0
  %341 = vmatpush.msra.mxu0 0.0
  %342 = vmatpush.msra.mxu0 0.0
  %343 = vmatpush.msra.mxu0 0.0
  %344 = vmatpush.msra.mxu0 0.0
  %345 = vmatpush.msra.mxu0 0.0
  %346 = vmatpush.msra.mxu0 0.0
  %347 = vmatpush.msra.mxu0 0.0
  %348 = vmatpush.msra.mxu0 %v331
  %349 = vmatmul.f32.gmra.mxu0 %v282
  %v350 = vpop.f32.mrf.mxu0
  %v351 = vadd.f32 0.0, %v350
  %352 = vmatmul.f32.gmra.mxu0 %v285
  %v353 = vpop.f32.mrf.mxu0
  %v354 = vadd.f32 0.0, %v353
  %355 = vmatmul.f32.gmra.mxu0 %v288
  %v356 = vpop.f32.mrf.mxu0
  %v357 = vadd.f32 0.0, %v356
  %358 = vmatmul.f32.gmra.mxu0 %v291
  %v359 = vpop.f32.mrf.mxu0
  %v360 = vadd.f32 0.0, %v359
  %361 = vmatmul.f32.gmra.mxu0 %v294
  %v362 = vpop.f32.mrf.mxu0
  %v363 = vadd.f32 0.0, %v362
  %364 = vmatmul.f32.gmra.mxu0 %v297
  %v365 = vpop.f32.mrf.mxu0
  %v366 = vadd.f32 0.0, %v365
  %367 = vmatmul.f32.gmra.mxu0 %v300
  %v368 = vpop.f32.mrf.mxu0
  %v369 = vadd.f32 0.0, %v368
  %370 = vmatmul.f32.gmra.mxu0 %v303
  %v371 = vpop.f32.mrf.mxu0
  %v372 = vadd.f32 0.0, %v371
  %373 = vmatmul.f32.gmra.mxu0 %v306
  %v374 = vpop.f32.mrf.mxu0
  %v375 = vadd.f32 0.0, %v374
  %376 = vmatmul.f32.gmra.mxu0 %v309
  %v377 = vpop.f32.mrf.mxu0
  %v378 = vadd.f32 0.0, %v377
  %379 = vmatmul.f32.gmra.mxu0 %v312
  %v380 = vpop.f32.mrf.mxu0
  %v381 = vadd.f32 0.0, %v380
  %382 = vmatmul.f32.gmra.mxu0 %v315
  %v383 = vpop.f32.mrf.mxu0
  %v384 = vadd.f32 0.0, %v383
  %385 = vmatmul.f32.gmra.mxu0 %v318
  %v386 = vpop.f32.mrf.mxu0
  %v387 = vadd.f32 0.0, %v386
  %388 = vmatmul.f32.gmra.mxu0 %v321
  %v389 = vpop.f32.mrf.mxu0
  %v390 = vadd.f32 0.0, %v389
  %391 = vmatmul.f32.gmra.mxu0 %v324
  %v392 = vpop.f32.mrf.mxu0
  %v393 = vadd.f32 0.0, %v392
  %394 = vmatmul.f32.gmra.mxu0 %v327
  %v395 = vpop.f32.mrf.mxu0
  %v396 = vadd.f32 0.0, %v395
  %397 = vdwg.mxu0
  %v398 = vld [vmem:[%s4] sm:$0xff]
  %v399 = vld [vmem:[%s4 + $0x8] sm:$0xff]
  %v400 = vld [vmem:[%s4 + $0x10] sm:$0xff]
  %v401 = vld [vmem:[%s4 + $0x18] sm:$0xff]
  %v402 = vld [vmem:[%s4 + $0x20] sm:$0xff]
  %v403 = vld [vmem:[%s4 + $0x28] sm:$0xff]
  %v404 = vld [vmem:[%s4 + $0x30] sm:$0xff]
  %v405 = vld [vmem:[%s4 + $0x38] sm:$0xff]
  %v406 = vld [vmem:[%s4 + $0x40] sm:$0xff]
  %v407 = vld [vmem:[%s4 + $0x48] sm:$0xff]
  %v408 = vld [vmem:[%s4 + $0x50] sm:$0xff]
  %v409 = vld [vmem:[%s4 + $0x58] sm:$0xff]
  %v410 = vld [vmem:[%s4 + $0x60] sm:$0xff]
  %v411 = vld [vmem:[%s4 + $0x68] sm:$0xff]
  %v412 = vld [vmem:[%s4 + $0x70] sm:$0xff]
  %v413 = vld [vmem:[%s4 + $0x78] sm:$0xff]
  %415 = vset.pattern.permute.xlu0 0
  %416 = vperm.xlu0 %415, %v398
  %v417 = vpop.permute.xlu0 %416
  %420 = vset.pattern.permute.xlu0 0
  %421 = vperm.xlu0 %420, %v399
  %v422 = vpop.permute.xlu0 %421
  %425 = vset.pattern.permute.xlu0 0
  %426 = vperm.xlu0 %425, %v400
  %v427 = vpop.permute.xlu0 %426
  %430 = vset.pattern.permute.xlu0 0
  %431 = vperm.xlu0 %430, %v401
  %v432 = vpop.permute.xlu0 %431
  %435 = vset.pattern.permute.xlu0 0
  %436 = vperm.xlu0 %435, %v402
  %v437 = vpop.permute.xlu0 %436
  %440 = vset.pattern.permute.xlu0 0
  %441 = vperm.xlu0 %440, %v403
  %v442 = vpop.permute.xlu0 %441
  %445 = vset.pattern.permute.xlu0 0
  %446 = vperm.xlu0 %445, %v404
  %v447 = vpop.permute.xlu0 %446
  %450 = vset.pattern.permute.xlu0 0
  %451 = vperm.xlu0 %450, %v405
  %v452 = vpop.permute.xlu0 %451
  %455 = vset.pattern.permute.xlu0 0
  %456 = vperm.xlu0 %455, %v406
  %v457 = vpop.permute.xlu0 %456
  %460 = vset.pattern.permute.xlu0 0
  %461 = vperm.xlu0 %460, %v407
  %v462 = vpop.permute.xlu0 %461
  %465 = vset.pattern.permute.xlu0 0
  %466 = vperm.xlu0 %465, %v408
  %v467 = vpop.permute.xlu0 %466
  %470 = vset.pattern.permute.xlu0 0
  %471 = vperm.xlu0 %470, %v409
  %v472 = vpop.permute.xlu0 %471
  %475 = vset.pattern.permute.xlu0 0
  %476 = vperm.xlu0 %475, %v410
  %v477 = vpop.permute.xlu0 %476
  %480 = vset.pattern.permute.xlu0 0
  %481 = vperm.xlu0 %480, %v411
  %v482 = vpop.permute.xlu0 %481
  %485 = vset.pattern.permute.xlu0 0
  %486 = vperm.xlu0 %485, %v412
  %v487 = vpop.permute.xlu0 %486
  %490 = vset.pattern.permute.xlu0 0
  %491 = vperm.xlu0 %490, %v413
  %v492 = vpop.permute.xlu0 %491
  %v494 = vld [vmem:[%s5] sm:$0x1]
  %s495 = sadd.s32 %s24, 128
  %p496 = scmp.lt.s32.totalorder %s23, %s495
  %s497 = sadd.s32 %s23, 128
  %p498 = scmp.lt.s32.totalorder %s24, %s497
  %p499 = pnand %p496, %p498
  %p500 = pneg %p499
  %p501 = por %p500, %p25
  // Predicated region
  $region30: #{tpu_custom_call.1} parent=0 // pred_check
    %p502 = pneg %p501
  $region31: #{tpu_custom_call.1} parent=0 // pred_check_branch
    %504 = sbr.rel (%p502) target = $region33
  $region32: #{tpu_custom_call.1} parent=0 // pred_region
    %v505 = vlaneseq
    %v506 = vand.u32 %v505, 127
    %v507 = vstv %s24
    %v508 = vadd.s32 %v507, %v506
    %vm509 = vcmp.lt.s32.totalorder %v508, 8
    %v510 = vsel %vm509, %v247, -1e+30
    %v511 = vsel %vm509, %v248, -1e+30
    %v512 = vsel %vm509, %v249, -1e+30
    %v513 = vsel %vm509, %v250, -1e+30
    %v514 = vsel %vm509, %v251, -1e+30
    %v515 = vsel %vm509, %v252, -1e+30
    %v516 = vsel %vm509, %v253, -1e+30
    %v517 = vsel %vm509, %v254, -1e+30
    %v518 = vsel %vm509, %v255, -1e+30
    %v519 = vsel %vm509, %v256, -1e+30
    %v520 = vsel %vm509, %v257, -1e+30
    %v521 = vsel %vm509, %v258, -1e+30
    %v522 = vsel %vm509, %v259, -1e+30
    %v523 = vsel %vm509, %v260, -1e+30
    %v524 = vsel %vm509, %v261, -1e+30
    %v525 = vsel %vm509, %v262, -1e+30
    %v526 = vld [vmem:[#allocation2] sm:$0xff]
    %v527 = vld [vmem:[#allocation2 + $0x8] sm:$0xff]
    %v528 = vld [vmem:[#allocation2 + $0x10] sm:$0xff]
    %v529 = vld [vmem:[#allocation2 + $0x18] sm:$0xff]
    %v530 = vld [vmem:[#allocation2 + $0x20] sm:$0xff]
    %v531 = vld [vmem:[#allocation2 + $0x28] sm:$0xff]
    %v532 = vld [vmem:[#allocation2 + $0x30] sm:$0xff]
    %v533 = vld [vmem:[#allocation2 + $0x38] sm:$0xff]
    %v534 = vld [vmem:[#allocation2 + $0x40] sm:$0xff]
    %v535 = vld [vmem:[#allocation2 + $0x48] sm:$0xff]
    %v536 = vld [vmem:[#allocation2 + $0x50] sm:$0xff]
    %v537 = vld [vmem:[#allocation2 + $0x58] sm:$0xff]
    %v538 = vld [vmem:[#allocation2 + $0x60] sm:$0xff]
    %v539 = vld [vmem:[#allocation2 + $0x68] sm:$0xff]
    %v540 = vld [vmem:[#allocation2 + $0x70] sm:$0xff]
    %v541 = vld [vmem:[#allocation2 + $0x78] sm:$0xff]
    %v542 = vmax.f32 %v526, %v510
    %v543 = vmax.f32 %v527, %v511
    %v544 = vmax.f32 %v528, %v512
    %v545 = vmax.f32 %v529, %v513
    %v546 = vmax.f32 %v530, %v514
    %v547 = vmax.f32 %v531, %v515
    %v548 = vmax.f32 %v532, %v516
    %v549 = vmax.f32 %v533, %v517
    %v550 = vmax.f32 %v534, %v518
    %v551 = vmax.f32 %v535, %v519
    %v552 = vmax.f32 %v536, %v520
    %v553 = vmax.f32 %v537, %v521
    %v554 = vmax.f32 %v538, %v522
    %v555 = vmax.f32 %v539, %v523
    %v556 = vmax.f32 %v540, %v524
    %v557 = vmax.f32 %v541, %v525
    %v558 = vsub.f32 %v526, %v542
    %v559 = vsub.f32 %v527, %v543
    %v560 = vsub.f32 %v528, %v544
    %v561 = vsub.f32 %v529, %v545
    %v562 = vsub.f32 %v530, %v546
    %v563 = vsub.f32 %v531, %v547
    %v564 = vsub.f32 %v532, %v548
    %v565 = vsub.f32 %v533, %v549
    %v566 = vsub.f32 %v534, %v550
    %v567 = vsub.f32 %v535, %v551
    %v568 = vsub.f32 %v536, %v552
    %v569 = vsub.f32 %v537, %v553
    %v570 = vsub.f32 %v538, %v554
    %v571 = vsub.f32 %v539, %v555
    %v572 = vsub.f32 %v540, %v556
    %v573 = vsub.f32 %v541, %v557
    %v574 = vmul.f32 %v558, 1.442695
    %v575 = vpow.pop %v574
    %v576 = vmul.f32 %v559, 1.442695
    %v577 = vpow.pop %v576
    %v578 = vmul.f32 %v560, 1.442695
    %v579 = vpow.pop %v578
    %v580 = vmul.f32 %v561, 1.442695
    %v581 = vpow.pop %v580
    %v582 = vmul.f32 %v562, 1.442695
    %v583 = vpow.pop %v582
    %v584 = vmul.f32 %v563, 1.442695
    %v585 = vpow.pop %v584
    %v586 = vmul.f32 %v564, 1.442695
    %v587 = vpow.pop %v586
    %v588 = vmul.f32 %v565, 1.442695
    %v589 = vpow.pop %v588
    %v590 = vmul.f32 %v566, 1.442695
    %v591 = vpow.pop %v590
    %v592 = vmul.f32 %v567, 1.442695
    %v593 = vpow.pop %v592
    %v594 = vmul.f32 %v568, 1.442695
    %v595 = vpow.pop %v594
    %v596 = vmul.f32 %v569, 1.442695
    %v597 = vpow.pop %v596
    %v598 = vmul.f32 %v570, 1.442695
    %v599 = vpow.pop %v598
    %v600 = vmul.f32 %v571, 1.442695
    %v601 = vpow.pop %v600
    %v602 = vmul.f32 %v572, 1.442695
    %v603 = vpow.pop %v602
    %v604 = vmul.f32 %v573, 1.442695
    %v605 = vpow.pop %v604
    %v606 = vlaneseq
    %v607 = vshrl.u32 %v606, 7
    %v608 = vadd.s32 %v607, 8
    %v609 = vadd.s32 %v607, 16
    %v610 = vadd.s32 %v607, 24
    %v611 = vadd.s32 %v607, 32
    %v612 = vadd.s32 %v607, 40
    %v613 = vadd.s32 %v607, 48
    %v614 = vadd.s32 %v607, 56
    %v615 = vadd.s32 %v607, 64
    %v616 = vadd.s32 %v607, 72
    %v617 = vadd.s32 %v607, 80
    %v618 = vadd.s32 %v607, 88
    %v619 = vadd.s32 %v607, 96
    %v620 = vadd.s32 %v607, 104
    %v621 = vadd.s32 %v607, 112
    %v622 = vadd.s32 %v607, 120
    %v623 = vstv %s23
    %v624 = vadd.s32 %v623, %v607
    %v625 = vadd.s32 %v623, %v608
    %v626 = vadd.s32 %v623, %v609
    %v627 = vadd.s32 %v623, %v610
    %v628 = vadd.s32 %v623, %v611
    %v629 = vadd.s32 %v623, %v612
    %v630 = vadd.s32 %v623, %v613
    %v631 = vadd.s32 %v623, %v614
    %v632 = vadd.s32 %v623, %v615
    %v633 = vadd.s32 %v623, %v616
    %v634 = vadd.s32 %v623, %v617
    %v635 = vadd.s32 %v623, %v618
    %v636 = vadd.s32 %v623, %v619
    %v637 = vadd.s32 %v623, %v620
    %v638 = vadd.s32 %v623, %v621
    %v639 = vadd.s32 %v623, %v622
    %v641 = vperm.slane %v494, 0
    %v643 = vadd.f32 %v417, %v641
    %v644 = vadd.f32 %v422, %v641
    %v645 = vadd.f32 %v427, %v641
    %v646 = vadd.f32 %v432, %v641
    %v647 = vadd.f32 %v437, %v641
    %v648 = vadd.f32 %v442, %v641
    %v649 = vadd.f32 %v447, %v641
    %v650 = vadd.f32 %v452, %v641
    %v651 = vadd.f32 %v457, %v641
    %v652 = vadd.f32 %v462, %v641
    %v653 = vadd.f32 %v467, %v641
    %v654 = vadd.f32 %v472, %v641
    %v655 = vadd.f32 %v477, %v641
    %v656 = vadd.f32 %v482, %v641
    %v657 = vadd.f32 %v487, %v641
    %v658 = vadd.f32 %v492, %v641
    %v659 = vsub.f32 %v643, %v351
    %v660 = vsub.f32 %v644, %v354
    %v661 = vsub.f32 %v645, %v357
    %v662 = vsub.f32 %v646, %v360
    %v663 = vsub.f32 %v647, %v363
    %v664 = vsub.f32 %v648, %v366
    %v665 = vsub.f32 %v649, %v369
    %v666 = vsub.f32 %v650, %v372
    %v667 = vsub.f32 %v651, %v375
    %v668 = vsub.f32 %v652, %v378
    %v669 = vsub.f32 %v653, %v381
    %v670 = vsub.f32 %v654, %v384
    %v671 = vsub.f32 %v655, %v387
    %v672 = vsub.f32 %v656, %v390
    %v673 = vsub.f32 %v657, %v393
    %v674 = vsub.f32 %v658, %v396
    %v675 = vadd.f32 %v659, 1e-08
    %v676 = vadd.f32 %v660, 1e-08
    %v677 = vadd.f32 %v661, 1e-08
    %v678 = vadd.f32 %v662, 1e-08
    %v679 = vadd.f32 %v663, 1e-08
    %v680 = vadd.f32 %v664, 1e-08
    %v681 = vadd.f32 %v665, 1e-08
    %v682 = vadd.f32 %v666, 1e-08
    %v683 = vadd.f32 %v667, 1e-08
    %v684 = vadd.f32 %v668, 1e-08
    %v685 = vadd.f32 %v669, 1e-08
    %v686 = vadd.f32 %v670, 1e-08
    %v687 = vadd.f32 %v671, 1e-08
    %v688 = vadd.f32 %v672, 1e-08
    %v689 = vadd.f32 %v673, 1e-08
    %v690 = vadd.f32 %v674, 1e-08
    %v691 = vmul.f32 %v675, 0.3
    %v692 = vmul.f32 %v676, 0.3
    %v693 = vmul.f32 %v677, 0.3
    %v694 = vmul.f32 %v678, 0.3
    %v695 = vmul.f32 %v679, 0.3
    %v696 = vmul.f32 %v680, 0.3
    %v697 = vmul.f32 %v681, 0.3
    %v698 = vmul.f32 %v682, 0.3
    %v699 = vmul.f32 %v683, 0.3
    %v700 = vmul.f32 %v684, 0.3
    %v701 = vmul.f32 %v685, 0.3
    %v702 = vmul.f32 %v686, 0.3
    %v703 = vmul.f32 %v687, 0.3
    %v704 = vmul.f32 %v688, 0.3
    %v705 = vmul.f32 %v689, 0.3
    %v706 = vmul.f32 %v690, 0.3
    %vm707 = vcmp.ge.f32.partialorder %v351, %v691
    %vm708 = vcmp.ge.f32.partialorder %v354, %v692
    %vm709 = vcmp.ge.f32.partialorder %v357, %v693
    %vm710 = vcmp.ge.f32.partialorder %v360, %v694
    %vm711 = vcmp.ge.f32.partialorder %v363, %v695
    %vm712 = vcmp.ge.f32.partialorder %v366, %v696
    %vm713 = vcmp.ge.f32.partialorder %v369, %v697
    %vm714 = vcmp.ge.f32.partialorder %v372, %v698
    %vm715 = vcmp.ge.f32.partialorder %v375, %v699
    %vm716 = vcmp.ge.f32.partialorder %v378, %v700
    %vm717 = vcmp.ge.f32.partialorder %v381, %v701
    %vm718 = vcmp.ge.f32.partialorder %v384, %v702
    %vm719 = vcmp.ge.f32.partialorder %v387, %v703
    %vm720 = vcmp.ge.f32.partialorder %v390, %v704
    %vm721 = vcmp.ge.f32.partialorder %v393, %v705
    %vm722 = vcmp.ge.f32.partialorder %v396, %v706
    %v723 = vsub.f32 %v247, %v542
    %v724 = vsub.f32 %v248, %v543
    %v725 = vsub.f32 %v249, %v544
    %v726 = vsub.f32 %v250, %v545
    %v727 = vsub.f32 %v251, %v546
    %v728 = vsub.f32 %v252, %v547
    %v729 = vsub.f32 %v253, %v548
    %v730 = vsub.f32 %v254, %v549
    %v731 = vsub.f32 %v255, %v550
    %v732 = vsub.f32 %v256, %v551
    %v733 = vsub.f32 %v257, %v552
    %v734 = vsub.f32 %v258, %v553
    %v735 = vsub.f32 %v259, %v554
    %v736 = vsub.f32 %v260, %v555
    %v737 = vsub.f32 %v261, %v556
    %v738 = vsub.f32 %v262, %v557
    %v739 = vmul.f32 %v723, 1.442695
    %v740 = vpow.pop %v739
    %v741 = vmul.f32 %v724, 1.442695
    %v742 = vpow.pop %v741
    %v743 = vmul.f32 %v725, 1.442695
    %v744 = vpow.pop %v743
    %v745 = vmul.f32 %v726, 1.442695
    %v746 = vpow.pop %v745
    %v747 = vmul.f32 %v727, 1.442695
    %v748 = vpow.pop %v747
    %v749 = vmul.f32 %v728, 1.442695
    %v750 = vpow.pop %v749
    %v751 = vmul.f32 %v729, 1.442695
    %v752 = vpow.pop %v751
    %v753 = vmul.f32 %v730, 1.442695
    %v754 = vpow.pop %v753
    %v755 = vmul.f32 %v731, 1.442695
    %v756 = vpow.pop %v755
    %v757 = vmul.f32 %v732, 1.442695
    %v758 = vpow.pop %v757
    %v759 = vmul.f32 %v733, 1.442695
    %v760 = vpow.pop %v759
    %v761 = vmul.f32 %v734, 1.442695
    %v762 = vpow.pop %v761
    %v763 = vmul.f32 %v735, 1.442695
    %v764 = vpow.pop %v763
    %v765 = vmul.f32 %v736, 1.442695
    %v766 = vpow.pop %v765
    %v767 = vmul.f32 %v737, 1.442695
    %v768 = vpow.pop %v767
    %v769 = vmul.f32 %v738, 1.442695
    %v770 = vpow.pop %v769
    %vm771 = vcmp.ne.s32.totalorder %v624, %v508
    %vm772 = vcmp.ne.s32.totalorder %v625, %v508
    %vm773 = vcmp.ne.s32.totalorder %v626, %v508
    %vm774 = vcmp.ne.s32.totalorder %v627, %v508
    %vm775 = vcmp.ne.s32.totalorder %v628, %v508
    %vm776 = vcmp.ne.s32.totalorder %v629, %v508
    %vm777 = vcmp.ne.s32.totalorder %v630, %v508
    %vm778 = vcmp.ne.s32.totalorder %v631, %v508
    %vm779 = vcmp.ne.s32.totalorder %v632, %v508
    %vm780 = vcmp.ne.s32.totalorder %v633, %v508
    %vm781 = vcmp.ne.s32.totalorder %v634, %v508
    %vm782 = vcmp.ne.s32.totalorder %v635, %v508
    %vm783 = vcmp.ne.s32.totalorder %v636, %v508
    %vm784 = vcmp.ne.s32.totalorder %v637, %v508
    %vm785 = vcmp.ne.s32.totalorder %v638, %v508
    %vm786 = vcmp.ne.s32.totalorder %v639, %v508
    %vm787 = vmand %vm771, %vm509
    %vm788 = vmand %vm772, %vm509
    %vm789 = vmand %vm773, %vm509
    %vm790 = vmand %vm774, %vm509
    %vm791 = vmand %vm775, %vm509
    %vm792 = vmand %vm776, %vm509
    %vm793 = vmand %vm777, %vm509
    %vm794 = vmand %vm778, %vm509
    %vm795 = vmand %vm779, %vm509
    %vm796 = vmand %vm780, %vm509
    %vm797 = vmand %vm781, %vm509
    %vm798 = vmand %vm782, %vm509
    %vm799 = vmand %vm783, %vm509
    %vm800 = vmand %vm784, %vm509
    %vm801 = vmand %vm785, %vm509
    %vm802 = vmand %vm786, %vm509
    %vm803 = vmand %vm707, %vm787
    %vm804 = vmand %vm708, %vm788
    %vm805 = vmand %vm709, %vm789
    %vm806 = vmand %vm710, %vm790
    %vm807 = vmand %vm711, %vm791
    %vm808 = vmand %vm712, %vm792
    %vm809 = vmand %vm713, %vm793
    %vm810 = vmand %vm714, %vm794
    %vm811 = vmand %vm715, %vm795
    %vm812 = vmand %vm716, %vm796
    %vm813 = vmand %vm717, %vm797
    %vm814 = vmand %vm718, %vm798
    %vm815 = vmand %vm719, %vm799
    %vm816 = vmand %vm720, %vm800
    %vm817 = vmand %vm721, %vm801
    %vm818 = vmand %vm722, %vm802
    %v819 = vsel %vm787, %v740, 0.0
    %v820 = vsel %vm788, %v742, 0.0
    %v821 = vsel %vm789, %v744, 0.0
    %v822 = vsel %vm790, %v746, 0.0
    %v823 = vsel %vm791, %v748, 0.0
    %v824 = vsel %vm792, %v750, 0.0
    %v825 = vsel %vm793, %v752, 0.0
    %v826 = vsel %vm794, %v754, 0.0
    %v827 = vsel %vm795, %v756, 0.0
    %v828 = vsel %vm796, %v758, 0.0
    %v829 = vsel %vm797, %v760, 0.0
    %v830 = vsel %vm798, %v762, 0.0
    %v831 = vsel %vm799, %v764, 0.0
    %v832 = vsel %vm800, %v766, 0.0
    %v833 = vsel %vm801, %v768, 0.0
    %v834 = vsel %vm802, %v770, 0.0
    %v835 = vsel %vm803, 1, 0
    %v836 = vsel %vm804, 1, 0
    %v837 = vsel %vm805, 1, 0
    %v838 = vsel %vm806, 1, 0
    %v839 = vsel %vm807, 1, 0
    %v840 = vsel %vm808, 1, 0
    %v841 = vsel %vm809, 1, 0
    %v842 = vsel %vm810, 1, 0
    %v843 = vsel %vm811, 1, 0
    %v844 = vsel %vm812, 1, 0
    %v845 = vsel %vm813, 1, 0
    %v846 = vsel %vm814, 1, 0
    %v847 = vsel %vm815, 1, 0
    %v848 = vsel %vm816, 1, 0
    %v849 = vsel %vm817, 1, 0
    %v850 = vsel %vm818, 1, 0
    %v851 = vcvt.s32.f32 %v835
    %v852 = vcvt.s32.f32 %v836
    %v853 = vcvt.s32.f32 %v837
    %v854 = vcvt.s32.f32 %v838
    %v855 = vcvt.s32.f32 %v839
    %v856 = vcvt.s32.f32 %v840
    %v857 = vcvt.s32.f32 %v841
    %v858 = vcvt.s32.f32 %v842
    %v859 = vcvt.s32.f32 %v843
    %v860 = vcvt.s32.f32 %v844
    %v861 = vcvt.s32.f32 %v845
    %v862 = vcvt.s32.f32 %v846
    %v863 = vcvt.s32.f32 %v847
    %v864 = vcvt.s32.f32 %v848
    %v865 = vcvt.s32.f32 %v849
    %v866 = vcvt.s32.f32 %v850
    %v867 = vmul.f32 %v851, %v351
    %v868 = vmul.f32 %v852, %v354
    %v869 = vmul.f32 %v853, %v357
    %v870 = vmul.f32 %v854, %v360
    %v871 = vmul.f32 %v855, %v363
    %v872 = vmul.f32 %v856, %v366
    %v873 = vmul.f32 %v857, %v369
    %v874 = vmul.f32 %v858, %v372
    %v875 = vmul.f32 %v859, %v375
    %v876 = vmul.f32 %v860, %v378
    %v877 = vmul.f32 %v861, %v381
    %v878 = vmul.f32 %v862, %v384
    %v879 = vmul.f32 %v863, %v387
    %v880 = vmul.f32 %v864, %v390
    %v881 = vmul.f32 %v865, %v393
    %v882 = vmul.f32 %v866, %v396
    %v883 = vrcp.pop %v675
    %v884 = vrcp.pop %v676
    %v885 = vrcp.pop %v677
    %v886 = vrcp.pop %v678
    %v887 = vrcp.pop %v679
    %v888 = vrcp.pop %v680
    %v889 = vrcp.pop %v681
    %v890 = vrcp.pop %v682
    %v891 = vrcp.pop %v683
    %v892 = vrcp.pop %v684
    %v893 = vrcp.pop %v685
    %v894 = vrcp.pop %v686
    %v895 = vrcp.pop %v687
    %v896 = vrcp.pop %v688
    %v897 = vrcp.pop %v689
    %v898 = vrcp.pop %v690
    %v899 = vmul.f32 %v867, %v883
    %v900 = vmul.f32 %v868, %v884
    %v901 = vmul.f32 %v869, %v885
    %v902 = vmul.f32 %v870, %v886
    %v903 = vmul.f32 %v871, %v887
    %v904 = vmul.f32 %v872, %v888
    %v905 = vmul.f32 %v873, %v889
    %v906 = vmul.f32 %v874, %v890
    %v907 = vmul.f32 %v875, %v891
    %v908 = vmul.f32 %v876, %v892
    %v909 = vmul.f32 %v877, %v893
    %v910 = vmul.f32 %v878, %v894
    %v911 = vmul.f32 %v879, %v895
    %v912 = vmul.f32 %v880, %v896
    %v913 = vmul.f32 %v881, %v897
    %v914 = vmul.f32 %v882, %v898
    %v915 = vmul.f32 %v899, 3.3333333
    %v916 = vmul.f32 %v900, 3.3333333
    %v917 = vmul.f32 %v901, 3.3333333
    %v918 = vmul.f32 %v902, 3.3333333
    %v919 = vmul.f32 %v903, 3.3333333
    %v920 = vmul.f32 %v904, 3.3333333
    %v921 = vmul.f32 %v905, 3.3333333
    %v922 = vmul.f32 %v906, 3.3333333
    %v923 = vmul.f32 %v907, 3.3333333
    %v924 = vmul.f32 %v908, 3.3333333
    %v925 = vmul.f32 %v909, 3.3333333
    %v926 = vmul.f32 %v910, 3.3333333
    %v927 = vmul.f32 %v911, 3.3333333
    %v928 = vmul.f32 %v912, 3.3333333
    %v929 = vmul.f32 %v913, 3.3333333
    %v930 = vmul.f32 %v914, 3.3333333
    %v931 = vadd.f32 %v819, 0.0
    %v932 = vadd.f32 %v820, 0.0
    %v933 = vadd.f32 %v821, 0.0
    %v934 = vadd.f32 %v822, 0.0
    %v935 = vadd.f32 %v823, 0.0
    %v936 = vadd.f32 %v824, 0.0
    %v937 = vadd.f32 %v825, 0.0
    %v938 = vadd.f32 %v826, 0.0
    %v939 = vadd.f32 %v827, 0.0
    %v940 = vadd.f32 %v828, 0.0
    %v941 = vadd.f32 %v829, 0.0
    %v942 = vadd.f32 %v830, 0.0
    %v943 = vadd.f32 %v831, 0.0
    %v944 = vadd.f32 %v832, 0.0
    %v945 = vadd.f32 %v833, 0.0
    %v946 = vadd.f32 %v834, 0.0
    %v947 = vadd.f32 %v851, 0.0
    %v948 = vadd.f32 %v852, 0.0
    %v949 = vadd.f32 %v853, 0.0
    %v950 = vadd.f32 %v854, 0.0
    %v951 = vadd.f32 %v855, 0.0
    %v952 = vadd.f32 %v856, 0.0
    %v953 = vadd.f32 %v857, 0.0
    %v954 = vadd.f32 %v858, 0.0
    %v955 = vadd.f32 %v859, 0.0
    %v956 = vadd.f32 %v860, 0.0
    %v957 = vadd.f32 %v861, 0.0
    %v958 = vadd.f32 %v862, 0.0
    %v959 = vadd.f32 %v863, 0.0
    %v960 = vadd.f32 %v864, 0.0
    %v961 = vadd.f32 %v865, 0.0
    %v962 = vadd.f32 %v866, 0.0
    %v963 = vadd.f32 %v915, 0.0
    %v964 = vadd.f32 %v916, 0.0
    %v965 = vadd.f32 %v917, 0.0
    %v966 = vadd.f32 %v918, 0.0
    %v967 = vadd.f32 %v919, 0.0
    %v968 = vadd.f32 %v920, 0.0
    %v969 = vadd.f32 %v921, 0.0
    %v970 = vadd.f32 %v922, 0.0
    %v971 = vadd.f32 %v923, 0.0
    %v972 = vadd.f32 %v924, 0.0
    %v973 = vadd.f32 %v925, 0.0
    %v974 = vadd.f32 %v926, 0.0
    %v975 = vadd.f32 %v927, 0.0
    %v976 = vadd.f32 %v928, 0.0
    %v977 = vadd.f32 %v929, 0.0
    %v978 = vadd.f32 %v930, 0.0
    %v979 = vmul.f32 %v915, %v247
    %v980 = vmul.f32 %v916, %v248
    %v981 = vmul.f32 %v917, %v249
    %v982 = vmul.f32 %v918, %v250
    %v983 = vmul.f32 %v919, %v251
    %v984 = vmul.f32 %v920, %v252
    %v985 = vmul.f32 %v921, %v253
    %v986 = vmul.f32 %v922, %v254
    %v987 = vmul.f32 %v923, %v255
    %v988 = vmul.f32 %v924, %v256
    %v989 = vmul.f32 %v925, %v257
    %v990 = vmul.f32 %v926, %v258
    %v991 = vmul.f32 %v927, %v259
    %v992 = vmul.f32 %v928, %v260
    %v993 = vmul.f32 %v929, %v261
    %v994 = vmul.f32 %v930, %v262
    %v995 = vadd.f32 %v979, 0.0
    %v996 = vadd.f32 %v980, 0.0
    %v997 = vadd.f32 %v981, 0.0
    %v998 = vadd.f32 %v982, 0.0
    %v999 = vadd.f32 %v983, 0.0
    %v1000 = vadd.f32 %v984, 0.0
    %v1001 = vadd.f32 %v985, 0.0
    %v1002 = vadd.f32 %v986, 0.0
    %v1003 = vadd.f32 %v987, 0.0
    %v1004 = vadd.f32 %v988, 0.0
    %v1005 = vadd.f32 %v989, 0.0
    %v1006 = vadd.f32 %v990, 0.0
    %v1007 = vadd.f32 %v991, 0.0
    %v1008 = vadd.f32 %v992, 0.0
    %v1009 = vadd.f32 %v993, 0.0
    %v1010 = vadd.f32 %v994, 0.0
    %1011 = vst [vmem:[#allocation2] sm:$0xff] %v542
    %1012 = vst [vmem:[#allocation2 + $0x8] sm:$0xff] %v543
    %1013 = vst [vmem:[#allocation2 + $0x10] sm:$0xff] %v544
    %1014 = vst [vmem:[#allocation2 + $0x18] sm:$0xff] %v545
    %1015 = vst [vmem:[#allocation2 + $0x20] sm:$0xff] %v546
    %1016 = vst [vmem:[#allocation2 + $0x28] sm:$0xff] %v547
    %1017 = vst [vmem:[#allocation2 + $0x30] sm:$0xff] %v548
    %1018 = vst [vmem:[#allocation2 + $0x38] sm:$0xff] %v549
    %1019 = vst [vmem:[#allocation2 + $0x40] sm:$0xff] %v550
    %1020 = vst [vmem:[#allocation2 + $0x48] sm:$0xff] %v551
    %1021 = vst [vmem:[#allocation2 + $0x50] sm:$0xff] %v552
    %1022 = vst [vmem:[#allocation2 + $0x58] sm:$0xff] %v553
    %1023 = vst [vmem:[#allocation2 + $0x60] sm:$0xff] %v554
    %1024 = vst [vmem:[#allocation2 + $0x68] sm:$0xff] %v555
    %1025 = vst [vmem:[#allocation2 + $0x70] sm:$0xff] %v556
    %1026 = vst [vmem:[#allocation2 + $0x78] sm:$0xff] %v557
    %v1027 = vld [vmem:[#allocation3] sm:$0xff]
    %v1028 = vld [vmem:[#allocation3 + $0x8] sm:$0xff]
    %v1029 = vld [vmem:[#allocation3 + $0x10] sm:$0xff]
    %v1030 = vld [vmem:[#allocation3 + $0x18] sm:$0xff]
    %v1031 = vld [vmem:[#allocation3 + $0x20] sm:$0xff]
    %v1032 = vld [vmem:[#allocation3 + $0x28] sm:$0xff]
    %v1033 = vld [vmem:[#allocation3 + $0x30] sm:$0xff]
    %v1034 = vld [vmem:[#allocation3 + $0x38] sm:$0xff]
    %v1035 = vld [vmem:[#allocation3 + $0x40] sm:$0xff]
    %v1036 = vld [vmem:[#allocation3 + $0x48] sm:$0xff]
    %v1037 = vld [vmem:[#allocation3 + $0x50] sm:$0xff]
    %v1038 = vld [vmem:[#allocation3 + $0x58] sm:$0xff]
    %v1039 = vld [vmem:[#allocation3 + $0x60] sm:$0xff]
    %v1040 = vld [vmem:[#allocation3 + $0x68] sm:$0xff]
    %v1041 = vld [vmem:[#allocation3 + $0x70] sm:$0xff]
    %v1042 = vld [vmem:[#allocation3 + $0x78] sm:$0xff]
    %v1043 = vmul.f32 %v1027, %v575
    %v1044 = vmul.f32 %v1028, %v577
    %v1045 = vmul.f32 %v1029, %v579
    %v1046 = vmul.f32 %v1030, %v581
    %v1047 = vmul.f32 %v1031, %v583
    %v1048 = vmul.f32 %v1032, %v585
    %v1049 = vmul.f32 %v1033, %v587
    %v1050 = vmul.f32 %v1034, %v589
    %v1051 = vmul.f32 %v1035, %v591
    %v1052 = vmul.f32 %v1036, %v593
    %v1053 = vmul.f32 %v1037, %v595
    %v1054 = vmul.f32 %v1038, %v597
    %v1055 = vmul.f32 %v1039, %v599
    %v1056 = vmul.f32 %v1040, %v601
    %v1057 = vmul.f32 %v1041, %v603
    %v1058 = vmul.f32 %v1042, %v605
    %v1059 = vadd.f32 %v1043, %v931
    %v1060 = vadd.f32 %v1044, %v932
    %v1061 = vadd.f32 %v1045, %v933
    %v1062 = vadd.f32 %v1046, %v934
    %v1063 = vadd.f32 %v1047, %v935
    %v1064 = vadd.f32 %v1048, %v936
    %v1065 = vadd.f32 %v1049, %v937
    %v1066 = vadd.f32 %v1050, %v938
    %v1067 = vadd.f32 %v1051, %v939
    %v1068 = vadd.f32 %v1052, %v940
    %v1069 = vadd.f32 %v1053, %v941
    %v1070 = vadd.f32 %v1054, %v942
    %v1071 = vadd.f32 %v1055, %v943
    %v1072 = vadd.f32 %v1056, %v944
    %v1073 = vadd.f32 %v1057, %v945
    %v1074 = vadd.f32 %v1058, %v946
    %1075 = vst [vmem:[#allocation3] sm:$0xff] %v1059
    %1076 = vst [vmem:[#allocation3 + $0x8] sm:$0xff] %v1060
    %1077 = vst [vmem:[#allocation3 + $0x10] sm:$0xff] %v1061
    %1078 = vst [vmem:[#allocation3 + $0x18] sm:$0xff] %v1062
    %1079 = vst [vmem:[#allocation3 + $0x20] sm:$0xff] %v1063
    %1080 = vst [vmem:[#allocation3 + $0x28] sm:$0xff] %v1064
    %1081 = vst [vmem:[#allocation3 + $0x30] sm:$0xff] %v1065
    %1082 = vst [vmem:[#allocation3 + $0x38] sm:$0xff] %v1066
    %1083 = vst [vmem:[#allocation3 + $0x40] sm:$0xff] %v1067
    %1084 = vst [vmem:[#allocation3 + $0x48] sm:$0xff] %v1068
    %1085 = vst [vmem:[#allocation3 + $0x50] sm:$0xff] %v1069
    %1086 = vst [vmem:[#allocation3 + $0x58] sm:$0xff] %v1070
    %1087 = vst [vmem:[#allocation3 + $0x60] sm:$0xff] %v1071
    %1088 = vst [vmem:[#allocation3 + $0x68] sm:$0xff] %v1072
    %1089 = vst [vmem:[#allocation3 + $0x70] sm:$0xff] %v1073
    %1090 = vst [vmem:[#allocation3 + $0x78] sm:$0xff] %v1074
    %v1091 = vld [vmem:[#allocation4] sm:$0xff]
    %v1092 = vld [vmem:[#allocation4 + $0x8] sm:$0xff]
    %v1093 = vld [vmem:[#allocation4 + $0x10] sm:$0xff]
    %v1094 = vld [vmem:[#allocation4 + $0x18] sm:$0xff]
    %v1095 = vld [vmem:[#allocation4 + $0x20] sm:$0xff]
    %v1096 = vld [vmem:[#allocation4 + $0x28] sm:$0xff]
    %v1097 = vld [vmem:[#allocation4 + $0x30] sm:$0xff]
    %v1098 = vld [vmem:[#allocation4 + $0x38] sm:$0xff]
    %v1099 = vld [vmem:[#allocation4 + $0x40] sm:$0xff]
    %v1100 = vld [vmem:[#allocation4 + $0x48] sm:$0xff]
    %v1101 = vld [vmem:[#allocation4 + $0x50] sm:$0xff]
    %v1102 = vld [vmem:[#allocation4 + $0x58] sm:$0xff]
    %v1103 = vld [vmem:[#allocation4 + $0x60] sm:$0xff]
    %v1104 = vld [vmem:[#allocation4 + $0x68] sm:$0xff]
    %v1105 = vld [vmem:[#allocation4 + $0x70] sm:$0xff]
    %v1106 = vld [vmem:[#allocation4 + $0x78] sm:$0xff]
    %v1107 = vadd.f32 %v1091, %v995
    %v1108 = vadd.f32 %v1092, %v996
    %v1109 = vadd.f32 %v1093, %v997
    %v1110 = vadd.f32 %v1094, %v998
    %v1111 = vadd.f32 %v1095, %v999
    %v1112 = vadd.f32 %v1096, %v1000
    %v1113 = vadd.f32 %v1097, %v1001
    %v1114 = vadd.f32 %v1098, %v1002
    %v1115 = vadd.f32 %v1099, %v1003
    %v1116 = vadd.f32 %v1100, %v1004
    %v1117 = vadd.f32 %v1101, %v1005
    %v1118 = vadd.f32 %v1102, %v1006
    %v1119 = vadd.f32 %v1103, %v1007
    %v1120 = vadd.f32 %v1104, %v1008
    %v1121 = vadd.f32 %v1105, %v1009
    %v1122 = vadd.f32 %v1106, %v1010
    %1123 = vst [vmem:[#allocation4] sm:$0xff] %v1107
    %1124 = vst [vmem:[#allocation4 + $0x8] sm:$0xff] %v1108
    %1125 = vst [vmem:[#allocation4 + $0x10] sm:$0xff] %v1109
    %1126 = vst [vmem:[#allocation4 + $0x18] sm:$0xff] %v1110
    %1127 = vst [vmem:[#allocation4 + $0x20] sm:$0xff] %v1111
    %1128 = vst [vmem:[#allocation4 + $0x28] sm:$0xff] %v1112
    %1129 = vst [vmem:[#allocation4 + $0x30] sm:$0xff] %v1113
    %1130 = vst [vmem:[#allocation4 + $0x38] sm:$0xff] %v1114
    %1131 = vst [vmem:[#allocation4 + $0x40] sm:$0xff] %v1115
    %1132 = vst [vmem:[#allocation4 + $0x48] sm:$0xff] %v1116
    %1133 = vst [vmem:[#allocation4 + $0x50] sm:$0xff] %v1117
    %1134 = vst [vmem:[#allocation4 + $0x58] sm:$0xff] %v1118
    %1135 = vst [vmem:[#allocation4 + $0x60] sm:$0xff] %v1119
    %1136 = vst [vmem:[#allocation4 + $0x68] sm:$0xff] %v1120
    %1137 = vst [vmem:[#allocation4 + $0x70] sm:$0xff] %v1121
    %1138 = vst [vmem:[#allocation4 + $0x78] sm:$0xff] %v1122
    %v1139 = vld [vmem:[#allocation5] sm:$0xff]
    %v1140 = vld [vmem:[#allocation5 + $0x8] sm:$0xff]
    %v1141 = vld [vmem:[#allocation5 + $0x10] sm:$0xff]
    %v1142 = vld [vmem:[#allocation5 + $0x18] sm:$0xff]
    %v1143 = vld [vmem:[#allocation5 + $0x20] sm:$0xff]
    %v1144 = vld [vmem:[#allocation5 + $0x28] sm:$0xff]
    %v1145 = vld [vmem:[#allocation5 + $0x30] sm:$0xff]
    %v1146 = vld [vmem:[#allocation5 + $0x38] sm:$0xff]
    %v1147 = vld [vmem:[#allocation5 + $0x40] sm:$0xff]
    %v1148 = vld [vmem:[#allocation5 + $0x48] sm:$0xff]
    %v1149 = vld [vmem:[#allocation5 + $0x50] sm:$0xff]
    %v1150 = vld [vmem:[#allocation5 + $0x58] sm:$0xff]
    %v1151 = vld [vmem:[#allocation5 + $0x60] sm:$0xff]
    %v1152 = vld [vmem:[#allocation5 + $0x68] sm:$0xff]
    %v1153 = vld [vmem:[#allocation5 + $0x70] sm:$0xff]
    %v1154 = vld [vmem:[#allocation5 + $0x78] sm:$0xff]
    %v1155 = vadd.f32 %v1139, %v963
    %v1156 = vadd.f32 %v1140, %v964
    %v1157 = vadd.f32 %v1141, %v965
    %v1158 = vadd.f32 %v1142, %v966
    %v1159 = vadd.f32 %v1143, %v967
    %v1160 = vadd.f32 %v1144, %v968
    %v1161 = vadd.f32 %v1145, %v969
    %v1162 = vadd.f32 %v1146, %v970
    %v1163 = vadd.f32 %v1147, %v971
    %v1164 = vadd.f32 %v1148, %v972
    %v1165 = vadd.f32 %v1149, %v973
    %v1166 = vadd.f32 %v1150, %v974
    %v1167 = vadd.f32 %v1151, %v975
    %v1168 = vadd.f32 %v1152, %v976
    %v1169 = vadd.f32 %v1153, %v977
    %v1170 = vadd.f32 %v1154, %v978
    %1171 = vst [vmem:[#allocation5] sm:$0xff] %v1155
    %1172 = vst [vmem:[#allocation5 + $0x8] sm:$0xff] %v1156
    %1173 = vst [vmem:[#allocation5 + $0x10] sm:$0xff] %v1157
    %1174 = vst [vmem:[#allocation5 + $0x18] sm:$0xff] %v1158
    %1175 = vst [vmem:[#allocation5 + $0x20] sm:$0xff] %v1159
    %1176 = vst [vmem:[#allocation5 + $0x28] sm:$0xff] %v1160
    %1177 = vst [vmem:[#allocation5 + $0x30] sm:$0xff] %v1161
    %1178 = vst [vmem:[#allocation5 + $0x38] sm:$0xff] %v1162
    %1179 = vst [vmem:[#allocation5 + $0x40] sm:$0xff] %v1163
    %1180 = vst [vmem:[#allocation5 + $0x48] sm:$0xff] %v1164
    %1181 = vst [vmem:[#allocation5 + $0x50] sm:$0xff] %v1165
    %1182 = vst [vmem:[#allocation5 + $0x58] sm:$0xff] %v1166
    %1183 = vst [vmem:[#allocation5 + $0x60] sm:$0xff] %v1167
    %1184 = vst [vmem:[#allocation5 + $0x68] sm:$0xff] %v1168
    %1185 = vst [vmem:[#allocation5 + $0x70] sm:$0xff] %v1169
    %1186 = vst [vmem:[#allocation5 + $0x78] sm:$0xff] %v1170
    %v1187 = vld [vmem:[#allocation6] sm:$0xff]
    %v1188 = vld [vmem:[#allocation6 + $0x8] sm:$0xff]
    %v1189 = vld [vmem:[#allocation6 + $0x10] sm:$0xff]
    %v1190 = vld [vmem:[#allocation6 + $0x18] sm:$0xff]
    %v1191 = vld [vmem:[#allocation6 + $0x20] sm:$0xff]
    %v1192 = vld [vmem:[#allocation6 + $0x28] sm:$0xff]
    %v1193 = vld [vmem:[#allocation6 + $0x30] sm:$0xff]
    %v1194 = vld [vmem:[#allocation6 + $0x38] sm:$0xff]
    %v1195 = vld [vmem:[#allocation6 + $0x40] sm:$0xff]
    %v1196 = vld [vmem:[#allocation6 + $0x48] sm:$0xff]
    %v1197 = vld [vmem:[#allocation6 + $0x50] sm:$0xff]
    %v1198 = vld [vmem:[#allocation6 + $0x58] sm:$0xff]
    %v1199 = vld [vmem:[#allocation6 + $0x60] sm:$0xff]
    %v1200 = vld [vmem:[#allocation6 + $0x68] sm:$0xff]
    %v1201 = vld [vmem:[#allocation6 + $0x70] sm:$0xff]
    %v1202 = vld [vmem:[#allocation6 + $0x78] sm:$0xff]
    %v1203 = vadd.f32 %v1187, %v947
    %v1204 = vadd.f32 %v1188, %v948
    %v1205 = vadd.f32 %v1189, %v949
    %v1206 = vadd.f32 %v1190, %v950
    %v1207 = vadd.f32 %v1191, %v951
    %v1208 = vadd.f32 %v1192, %v952
    %v1209 = vadd.f32 %v1193, %v953
    %v1210 = vadd.f32 %v1194, %v954
    %v1211 = vadd.f32 %v1195, %v955
    %v1212 = vadd.f32 %v1196, %v956
    %v1213 = vadd.f32 %v1197, %v957
    %v1214 = vadd.f32 %v1198, %v958
    %v1215 = vadd.f32 %v1199, %v959
    %v1216 = vadd.f32 %v1200, %v960
    %v1217 = vadd.f32 %v1201, %v961
    %v1218 = vadd.f32 %v1202, %v962
    %1219 = vst [vmem:[#allocation6] sm:$0xff] %v1203
    %1220 = vst [vmem:[#allocation6 + $0x8] sm:$0xff] %v1204
    %1221 = vst [vmem:[#allocation6 + $0x10] sm:$0xff] %v1205
    %1222 = vst [vmem:[#allocation6 + $0x18] sm:$0xff] %v1206
    %1223 = vst [vmem:[#allocation6 + $0x20] sm:$0xff] %v1207
    %1224 = vst [vmem:[#allocation6 + $0x28] sm:$0xff] %v1208
    %1225 = vst [vmem:[#allocation6 + $0x30] sm:$0xff] %v1209
    %1226 = vst [vmem:[#allocation6 + $0x38] sm:$0xff] %v1210
    %1227 = vst [vmem:[#allocation6 + $0x40] sm:$0xff] %v1211
    %1228 = vst [vmem:[#allocation6 + $0x48] sm:$0xff] %v1212
    %1229 = vst [vmem:[#allocation6 + $0x50] sm:$0xff] %v1213
    %1230 = vst [vmem:[#allocation6 + $0x58] sm:$0xff] %v1214
    %1231 = vst [vmem:[#allocation6 + $0x60] sm:$0xff] %v1215
    %1232 = vst [vmem:[#allocation6 + $0x68] sm:$0xff] %v1216
    %1233 = vst [vmem:[#allocation6 + $0x70] sm:$0xff] %v1217
    %1234 = vst [vmem:[#allocation6 + $0x78] sm:$0xff] %v1218
  $region33: #{tpu_custom_call.1} parent=0 // pred_fallthru
    _
  %p1235 = pneg %p501
  // Predicated region
  $region34: #{tpu_custom_call.1} parent=0 // pred_check
    _
  $region35: #{tpu_custom_call.1} parent=0 // pred_check_branch
    %1237 = sbr.rel (%p501) target = $region37
  $region36: #{tpu_custom_call.1} parent=0 // pred_region
    %v1238 = vld [vmem:[#allocation2] sm:$0xff]
    %v1239 = vld [vmem:[#allocation2 + $0x8] sm:$0xff]
    %v1240 = vld [vmem:[#allocation2 + $0x10] sm:$0xff]
    %v1241 = vld [vmem:[#allocation2 + $0x18] sm:$0xff]
    %v1242 = vld [vmem:[#allocation2 + $0x20] sm:$0xff]
    %v1243 = vld [vmem:[#allocation2 + $0x28] sm:$0xff]
    %v1244 = vld [vmem:[#allocation2 + $0x30] sm:$0xff]
    %v1245 = vld [vmem:[#allocation2 + $0x38] sm:$0xff]
    %v1246 = vld [vmem:[#allocation2 + $0x40] sm:$0xff]
    %v1247 = vld [vmem:[#allocation2 + $0x48] sm:$0xff]
    %v1248 = vld [vmem:[#allocation2 + $0x50] sm:$0xff]
    %v1249 = vld [vmem:[#allocation2 + $0x58] sm:$0xff]
    %v1250 = vld [vmem:[#allocation2 + $0x60] sm:$0xff]
    %v1251 = vld [vmem:[#allocation2 + $0x68] sm:$0xff]
    %v1252 = vld [vmem:[#allocation2 + $0x70] sm:$0xff]
    %v1253 = vld [vmem:[#allocation2 + $0x78] sm:$0xff]
    %v1254 = vmax.f32 %v1238, %v247
    %v1255 = vmax.f32 %v1239, %v248
    %v1256 = vmax.f32 %v1240, %v249
    %v1257 = vmax.f32 %v1241, %v250
    %v1258 = vmax.f32 %v1242, %v251
    %v1259 = vmax.f32 %v1243, %v252
    %v1260 = vmax.f32 %v1244, %v253
    %v1261 = vmax.f32 %v1245, %v254
    %v1262 = vmax.f32 %v1246, %v255
    %v1263 = vmax.f32 %v1247, %v256
    %v1264 = vmax.f32 %v1248, %v257
    %v1265 = vmax.f32 %v1249, %v258
    %v1266 = vmax.f32 %v1250, %v259
    %v1267 = vmax.f32 %v1251, %v260
    %v1268 = vmax.f32 %v1252, %v261
    %v1269 = vmax.f32 %v1253, %v262
    %v1270 = vsub.f32 %v1238, %v1254
    %v1271 = vsub.f32 %v1239, %v1255
    %v1272 = vsub.f32 %v1240, %v1256
    %v1273 = vsub.f32 %v1241, %v1257
    %v1274 = vsub.f32 %v1242, %v1258
    %v1275 = vsub.f32 %v1243, %v1259
    %v1276 = vsub.f32 %v1244, %v1260
    %v1277 = vsub.f32 %v1245, %v1261
    %v1278 = vsub.f32 %v1246, %v1262
    %v1279 = vsub.f32 %v1247, %v1263
    %v1280 = vsub.f32 %v1248, %v1264
    %v1281 = vsub.f32 %v1249, %v1265
    %v1282 = vsub.f32 %v1250, %v1266
    %v1283 = vsub.f32 %v1251, %v1267
    %v1284 = vsub.f32 %v1252, %v1268
    %v1285 = vsub.f32 %v1253, %v1269
    %v1286 = vmul.f32 %v1270, 1.442695
    %v1287 = vpow.pop %v1286
    %v1288 = vmul.f32 %v1271, 1.442695
    %v1289 = vpow.pop %v1288
    %v1290 = vmul.f32 %v1272, 1.442695
    %v1291 = vpow.pop %v1290
    %v1292 = vmul.f32 %v1273, 1.442695
    %v1293 = vpow.pop %v1292
    %v1294 = vmul.f32 %v1274, 1.442695
    %v1295 = vpow.pop %v1294
    %v1296 = vmul.f32 %v1275, 1.442695
    %v1297 = vpow.pop %v1296
    %v1298 = vmul.f32 %v1276, 1.442695
    %v1299 = vpow.pop %v1298
    %v1300 = vmul.f32 %v1277, 1.442695
    %v1301 = vpow.pop %v1300
    %v1302 = vmul.f32 %v1278, 1.442695
    %v1303 = vpow.pop %v1302
    %v1304 = vmul.f32 %v1279, 1.442695
    %v1305 = vpow.pop %v1304
    %v1306 = vmul.f32 %v1280, 1.442695
    %v1307 = vpow.pop %v1306
    %v1308 = vmul.f32 %v1281, 1.442695
    %v1309 = vpow.pop %v1308
    %v1310 = vmul.f32 %v1282, 1.442695
    %v1311 = vpow.pop %v1310
    %v1312 = vmul.f32 %v1283, 1.442695
    %v1313 = vpow.pop %v1312
    %v1314 = vmul.f32 %v1284, 1.442695
    %v1315 = vpow.pop %v1314
    %v1316 = vmul.f32 %v1285, 1.442695
    %v1317 = vpow.pop %v1316
    %v1319 = vperm.slane %v494, 0
    %v1321 = vadd.f32 %v417, %v1319
    %v1322 = vadd.f32 %v422, %v1319
    %v1323 = vadd.f32 %v427, %v1319
    %v1324 = vadd.f32 %v432, %v1319
    %v1325 = vadd.f32 %v437, %v1319
    %v1326 = vadd.f32 %v442, %v1319
    %v1327 = vadd.f32 %v447, %v1319
    %v1328 = vadd.f32 %v452, %v1319
    %v1329 = vadd.f32 %v457, %v1319
    %v1330 = vadd.f32 %v462, %v1319
    %v1331 = vadd.f32 %v467, %v1319
    %v1332 = vadd.f32 %v472, %v1319
    %v1333 = vadd.f32 %v477, %v1319
    %v1334 = vadd.f32 %v482, %v1319
    %v1335 = vadd.f32 %v487, %v1319
    %v1336 = vadd.f32 %v492, %v1319
    %v1337 = vsub.f32 %v1321, %v351
    %v1338 = vsub.f32 %v1322, %v354
    %v1339 = vsub.f32 %v1323, %v357
    %v1340 = vsub.f32 %v1324, %v360
    %v1341 = vsub.f32 %v1325, %v363
    %v1342 = vsub.f32 %v1326, %v366
    %v1343 = vsub.f32 %v1327, %v369
    %v1344 = vsub.f32 %v1328, %v372
    %v1345 = vsub.f32 %v1329, %v375
    %v1346 = vsub.f32 %v1330, %v378
    %v1347 = vsub.f32 %v1331, %v381
    %v1348 = vsub.f32 %v1332, %v384
    %v1349 = vsub.f32 %v1333, %v387
    %v1350 = vsub.f32 %v1334, %v390
    %v1351 = vsub.f32 %v1335, %v393
    %v1352 = vsub.f32 %v1336, %v396
    %v1353 = vadd.f32 %v1337, 1e-08
    %v1354 = vadd.f32 %v1338, 1e-08
    %v1355 = vadd.f32 %v1339, 1e-08
    %v1356 = vadd.f32 %v1340, 1e-08
    %v1357 = vadd.f32 %v1341, 1e-08
    %v1358 = vadd.f32 %v1342, 1e-08
    %v1359 = vadd.f32 %v1343, 1e-08
    %v1360 = vadd.f32 %v1344, 1e-08
    %v1361 = vadd.f32 %v1345, 1e-08
    %v1362 = vadd.f32 %v1346, 1e-08
    %v1363 = vadd.f32 %v1347, 1e-08
    %v1364 = vadd.f32 %v1348, 1e-08
    %v1365 = vadd.f32 %v1349, 1e-08
    %v1366 = vadd.f32 %v1350, 1e-08
    %v1367 = vadd.f32 %v1351, 1e-08
    %v1368 = vadd.f32 %v1352, 1e-08
    %v1369 = vmul.f32 %v1353, 0.3
    %v1370 = vmul.f32 %v1354, 0.3
    %v1371 = vmul.f32 %v1355, 0.3
    %v1372 = vmul.f32 %v1356, 0.3
    %v1373 = vmul.f32 %v1357, 0.3
    %v1374 = vmul.f32 %v1358, 0.3
    %v1375 = vmul.f32 %v1359, 0.3
    %v1376 = vmul.f32 %v1360, 0.3
    %v1377 = vmul.f32 %v1361, 0.3
    %v1378 = vmul.f32 %v1362, 0.3
    %v1379 = vmul.f32 %v1363, 0.3
    %v1380 = vmul.f32 %v1364, 0.3
    %v1381 = vmul.f32 %v1365, 0.3
    %v1382 = vmul.f32 %v1366, 0.3
    %v1383 = vmul.f32 %v1367, 0.3
    %v1384 = vmul.f32 %v1368, 0.3
    %vm1385 = vcmp.ge.f32.partialorder %v351, %v1369
    %vm1386 = vcmp.ge.f32.partialorder %v354, %v1370
    %vm1387 = vcmp.ge.f32.partialorder %v357, %v1371
    %vm1388 = vcmp.ge.f32.partialorder %v360, %v1372
    %vm1389 = vcmp.ge.f32.partialorder %v363, %v1373
    %vm1390 = vcmp.ge.f32.partialorder %v366, %v1374
    %vm1391 = vcmp.ge.f32.partialorder %v369, %v1375
    %vm1392 = vcmp.ge.f32.partialorder %v372, %v1376
    %vm1393 = vcmp.ge.f32.partialorder %v375, %v1377
    %vm1394 = vcmp.ge.f32.partialorder %v378, %v1378
    %vm1395 = vcmp.ge.f32.partialorder %v381, %v1379
    %vm1396 = vcmp.ge.f32.partialorder %v384, %v1380
    %vm1397 = vcmp.ge.f32.partialorder %v387, %v1381
    %vm1398 = vcmp.ge.f32.partialorder %v390, %v1382
    %vm1399 = vcmp.ge.f32.partialorder %v393, %v1383
    %vm1400 = vcmp.ge.f32.partialorder %v396, %v1384
    %v1401 = vsub.f32 %v247, %v1254
    %v1402 = vsub.f32 %v248, %v1255
    %v1403 = vsub.f32 %v249, %v1256
    %v1404 = vsub.f32 %v250, %v1257
    %v1405 = vsub.f32 %v251, %v1258
    %v1406 = vsub.f32 %v252, %v1259
    %v1407 = vsub.f32 %v253, %v1260
    %v1408 = vsub.f32 %v254, %v1261
    %v1409 = vsub.f32 %v255, %v1262
    %v1410 = vsub.f32 %v256, %v1263
    %v1411 = vsub.f32 %v257, %v1264
    %v1412 = vsub.f32 %v258, %v1265
    %v1413 = vsub.f32 %v259, %v1266
    %v1414 = vsub.f32 %v260, %v1267
    %v1415 = vsub.f32 %v261, %v1268
    %v1416 = vsub.f32 %v262, %v1269
    %v1417 = vmul.f32 %v1401, 1.442695
    %v1418 = vpow.pop %v1417
    %v1419 = vmul.f32 %v1402, 1.442695
    %v1420 = vpow.pop %v1419
    %v1421 = vmul.f32 %v1403, 1.442695
    %v1422 = vpow.pop %v1421
    %v1423 = vmul.f32 %v1404, 1.442695
    %v1424 = vpow.pop %v1423
    %v1425 = vmul.f32 %v1405, 1.442695
    %v1426 = vpow.pop %v1425
    %v1427 = vmul.f32 %v1406, 1.442695
    %v1428 = vpow.pop %v1427
    %v1429 = vmul.f32 %v1407, 1.442695
    %v1430 = vpow.pop %v1429
    %v1431 = vmul.f32 %v1408, 1.442695
    %v1432 = vpow.pop %v1431
    %v1433 = vmul.f32 %v1409, 1.442695
    %v1434 = vpow.pop %v1433
    %v1435 = vmul.f32 %v1410, 1.442695
    %v1436 = vpow.pop %v1435
    %v1437 = vmul.f32 %v1411, 1.442695
    %v1438 = vpow.pop %v1437
    %v1439 = vmul.f32 %v1412, 1.442695
    %v1440 = vpow.pop %v1439
    %v1441 = vmul.f32 %v1413, 1.442695
    %v1442 = vpow.pop %v1441
    %v1443 = vmul.f32 %v1414, 1.442695
    %v1444 = vpow.pop %v1443
    %v1445 = vmul.f32 %v1415, 1.442695
    %v1446 = vpow.pop %v1445
    %v1447 = vmul.f32 %v1416, 1.442695
    %v1448 = vpow.pop %v1447
    %v1449 = vsel %vm1385, 1, 0
    %v1450 = vsel %vm1386, 1, 0
    %v1451 = vsel %vm1387, 1, 0
    %v1452 = vsel %vm1388, 1, 0
    %v1453 = vsel %vm1389, 1, 0
    %v1454 = vsel %vm1390, 1, 0
    %v1455 = vsel %vm1391, 1, 0
    %v1456 = vsel %vm1392, 1, 0
    %v1457 = vsel %vm1393, 1, 0
    %v1458 = vsel %vm1394, 1, 0
    %v1459 = vsel %vm1395, 1, 0
    %v1460 = vsel %vm1396, 1, 0
    %v1461 = vsel %vm1397, 1, 0
    %v1462 = vsel %vm1398, 1, 0
    %v1463 = vsel %vm1399, 1, 0
    %v1464 = vsel %vm1400, 1, 0
    %v1465 = vcvt.s32.f32 %v1449
    %v1466 = vcvt.s32.f32 %v1450
    %v1467 = vcvt.s32.f32 %v1451
    %v1468 = vcvt.s32.f32 %v1452
    %v1469 = vcvt.s32.f32 %v1453
    %v1470 = vcvt.s32.f32 %v1454
    %v1471 = vcvt.s32.f32 %v1455
    %v1472 = vcvt.s32.f32 %v1456
    %v1473 = vcvt.s32.f32 %v1457
    %v1474 = vcvt.s32.f32 %v1458
    %v1475 = vcvt.s32.f32 %v1459
    %v1476 = vcvt.s32.f32 %v1460
    %v1477 = vcvt.s32.f32 %v1461
    %v1478 = vcvt.s32.f32 %v1462
    %v1479 = vcvt.s32.f32 %v1463
    %v1480 = vcvt.s32.f32 %v1464
    %v1481 = vmul.f32 %v1465, %v351
    %v1482 = vmul.f32 %v1466, %v354
    %v1483 = vmul.f32 %v1467, %v357
    %v1484 = vmul.f32 %v1468, %v360
    %v1485 = vmul.f32 %v1469, %v363
    %v1486 = vmul.f32 %v1470, %v366
    %v1487 = vmul.f32 %v1471, %v369
    %v1488 = vmul.f32 %v1472, %v372
    %v1489 = vmul.f32 %v1473, %v375
    %v1490 = vmul.f32 %v1474, %v378
    %v1491 = vmul.f32 %v1475, %v381
    %v1492 = vmul.f32 %v1476, %v384
    %v1493 = vmul.f32 %v1477, %v387
    %v1494 = vmul.f32 %v1478, %v390
    %v1495 = vmul.f32 %v1479, %v393
    %v1496 = vmul.f32 %v1480, %v396
    %v1497 = vrcp.pop %v1353
    %v1498 = vrcp.pop %v1354
    %v1499 = vrcp.pop %v1355
    %v1500 = vrcp.pop %v1356
    %v1501 = vrcp.pop %v1357
    %v1502 = vrcp.pop %v1358
    %v1503 = vrcp.pop %v1359
    %v1504 = vrcp.pop %v1360
    %v1505 = vrcp.pop %v1361
    %v1506 = vrcp.pop %v1362
    %v1507 = vrcp.pop %v1363
    %v1508 = vrcp.pop %v1364
    %v1509 = vrcp.pop %v1365
    %v1510 = vrcp.pop %v1366
    %v1511 = vrcp.pop %v1367
    %v1512 = vrcp.pop %v1368
    %v1513 = vmul.f32 %v1481, %v1497
    %v1514 = vmul.f32 %v1482, %v1498
    %v1515 = vmul.f32 %v1483, %v1499
    %v1516 = vmul.f32 %v1484, %v1500
    %v1517 = vmul.f32 %v1485, %v1501
    %v1518 = vmul.f32 %v1486, %v1502
    %v1519 = vmul.f32 %v1487, %v1503
    %v1520 = vmul.f32 %v1488, %v1504
    %v1521 = vmul.f32 %v1489, %v1505
    %v1522 = vmul.f32 %v1490, %v1506
    %v1523 = vmul.f32 %v1491, %v1507
    %v1524 = vmul.f32 %v1492, %v1508
    %v1525 = vmul.f32 %v1493, %v1509
    %v1526 = vmul.f32 %v1494, %v1510
    %v1527 = vmul.f32 %v1495, %v1511
    %v1528 = vmul.f32 %v1496, %v1512
    %v1529 = vmul.f32 %v1513, 3.3333333
    %v1530 = vmul.f32 %v1514, 3.3333333
    %v1531 = vmul.f32 %v1515, 3.3333333
    %v1532 = vmul.f32 %v1516, 3.3333333
    %v1533 = vmul.f32 %v1517, 3.3333333
    %v1534 = vmul.f32 %v1518, 3.3333333
    %v1535 = vmul.f32 %v1519, 3.3333333
    %v1536 = vmul.f32 %v1520, 3.3333333
    %v1537 = vmul.f32 %v1521, 3.3333333
    %v1538 = vmul.f32 %v1522, 3.3333333
    %v1539 = vmul.f32 %v1523, 3.3333333
    %v1540 = vmul.f32 %v1524, 3.3333333
    %v1541 = vmul.f32 %v1525, 3.3333333
    %v1542 = vmul.f32 %v1526, 3.3333333
    %v1543 = vmul.f32 %v1527, 3.3333333
    %v1544 = vmul.f32 %v1528, 3.3333333
    %v1545 = vadd.f32 %v1418, 0.0
    %v1546 = vadd.f32 %v1420, 0.0
    %v1547 = vadd.f32 %v1422, 0.0
    %v1548 = vadd.f32 %v1424, 0.0
    %v1549 = vadd.f32 %v1426, 0.0
    %v1550 = vadd.f32 %v1428, 0.0
    %v1551 = vadd.f32 %v1430, 0.0
    %v1552 = vadd.f32 %v1432, 0.0
    %v1553 = vadd.f32 %v1434, 0.0
    %v1554 = vadd.f32 %v1436, 0.0
    %v1555 = vadd.f32 %v1438, 0.0
    %v1556 = vadd.f32 %v1440, 0.0
    %v1557 = vadd.f32 %v1442, 0.0
    %v1558 = vadd.f32 %v1444, 0.0
    %v1559 = vadd.f32 %v1446, 0.0
    %v1560 = vadd.f32 %v1448, 0.0
    %v1561 = vadd.f32 %v1465, 0.0
    %v1562 = vadd.f32 %v1466, 0.0
    %v1563 = vadd.f32 %v1467, 0.0
    %v1564 = vadd.f32 %v1468, 0.0
    %v1565 = vadd.f32 %v1469, 0.0
    %v1566 = vadd.f32 %v1470, 0.0
    %v1567 = vadd.f32 %v1471, 0.0
    %v1568 = vadd.f32 %v1472, 0.0
    %v1569 = vadd.f32 %v1473, 0.0
    %v1570 = vadd.f32 %v1474, 0.0
    %v1571 = vadd.f32 %v1475, 0.0
    %v1572 = vadd.f32 %v1476, 0.0
    %v1573 = vadd.f32 %v1477, 0.0
    %v1574 = vadd.f32 %v1478, 0.0
    %v1575 = vadd.f32 %v1479, 0.0
    %v1576 = vadd.f32 %v1480, 0.0
    %v1577 = vadd.f32 %v1529, 0.0
    %v1578 = vadd.f32 %v1530, 0.0
    %v1579 = vadd.f32 %v1531, 0.0
    %v1580 = vadd.f32 %v1532, 0.0
    %v1581 = vadd.f32 %v1533, 0.0
    %v1582 = vadd.f32 %v1534, 0.0
    %v1583 = vadd.f32 %v1535, 0.0
    %v1584 = vadd.f32 %v1536, 0.0
    %v1585 = vadd.f32 %v1537, 0.0
    %v1586 = vadd.f32 %v1538, 0.0
    %v1587 = vadd.f32 %v1539, 0.0
    %v1588 = vadd.f32 %v1540, 0.0
    %v1589 = vadd.f32 %v1541, 0.0
    %v1590 = vadd.f32 %v1542, 0.0
    %v1591 = vadd.f32 %v1543, 0.0
    %v1592 = vadd.f32 %v1544, 0.0
    %v1593 = vmul.f32 %v1529, %v247
    %v1594 = vmul.f32 %v1530, %v248
    %v1595 = vmul.f32 %v1531, %v249
    %v1596 = vmul.f32 %v1532, %v250
    %v1597 = vmul.f32 %v1533, %v251
    %v1598 = vmul.f32 %v1534, %v252
    %v1599 = vmul.f32 %v1535, %v253
    %v1600 = vmul.f32 %v1536, %v254
    %v1601 = vmul.f32 %v1537, %v255
    %v1602 = vmul.f32 %v1538, %v256
    %v1603 = vmul.f32 %v1539, %v257
    %v1604 = vmul.f32 %v1540, %v258
    %v1605 = vmul.f32 %v1541, %v259
    %v1606 = vmul.f32 %v1542, %v260
    %v1607 = vmul.f32 %v1543, %v261
    %v1608 = vmul.f32 %v1544, %v262
    %v1609 = vadd.f32 %v1593, 0.0
    %v1610 = vadd.f32 %v1594, 0.0
    %v1611 = vadd.f32 %v1595, 0.0
    %v1612 = vadd.f32 %v1596, 0.0
    %v1613 = vadd.f32 %v1597, 0.0
    %v1614 = vadd.f32 %v1598, 0.0
    %v1615 = vadd.f32 %v1599, 0.0
    %v1616 = vadd.f32 %v1600, 0.0
    %v1617 = vadd.f32 %v1601, 0.0
    %v1618 = vadd.f32 %v1602, 0.0
    %v1619 = vadd.f32 %v1603, 0.0
    %v1620 = vadd.f32 %v1604, 0.0
    %v1621 = vadd.f32 %v1605, 0.0
    %v1622 = vadd.f32 %v1606, 0.0
    %v1623 = vadd.f32 %v1607, 0.0
    %v1624 = vadd.f32 %v1608, 0.0
    %1625 = vst [vmem:[#allocation2] sm:$0xff] %v1254
    %1626 = vst [vmem:[#allocation2 + $0x8] sm:$0xff] %v1255
    %1627 = vst [vmem:[#allocation2 + $0x10] sm:$0xff] %v1256
    %1628 = vst [vmem:[#allocation2 + $0x18] sm:$0xff] %v1257
    %1629 = vst [vmem:[#allocation2 + $0x20] sm:$0xff] %v1258
    %1630 = vst [vmem:[#allocation2 + $0x28] sm:$0xff] %v1259
    %1631 = vst [vmem:[#allocation2 + $0x30] sm:$0xff] %v1260
    %1632 = vst [vmem:[#allocation2 + $0x38] sm:$0xff] %v1261
    %1633 = vst [vmem:[#allocation2 + $0x40] sm:$0xff] %v1262
    %1634 = vst [vmem:[#allocation2 + $0x48] sm:$0xff] %v1263
    %1635 = vst [vmem:[#allocation2 + $0x50] sm:$0xff] %v1264
    %1636 = vst [vmem:[#allocation2 + $0x58] sm:$0xff] %v1265
    %1637 = vst [vmem:[#allocation2 + $0x60] sm:$0xff] %v1266
    %1638 = vst [vmem:[#allocation2 + $0x68] sm:$0xff] %v1267
    %1639 = vst [vmem:[#allocation2 + $0x70] sm:$0xff] %v1268
    %1640 = vst [vmem:[#allocation2 + $0x78] sm:$0xff] %v1269
    %v1641 = vld [vmem:[#allocation3] sm:$0xff]
    %v1642 = vld [vmem:[#allocation3 + $0x8] sm:$0xff]
    %v1643 = vld [vmem:[#allocation3 + $0x10] sm:$0xff]
    %v1644 = vld [vmem:[#allocation3 + $0x18] sm:$0xff]
    %v1645 = vld [vmem:[#allocation3 + $0x20] sm:$0xff]
    %v1646 = vld [vmem:[#allocation3 + $0x28] sm:$0xff]
    %v1647 = vld [vmem:[#allocation3 + $0x30] sm:$0xff]
    %v1648 = vld [vmem:[#allocation3 + $0x38] sm:$0xff]
    %v1649 = vld [vmem:[#allocation3 + $0x40] sm:$0xff]
    %v1650 = vld [vmem:[#allocation3 + $0x48] sm:$0xff]
    %v1651 = vld [vmem:[#allocation3 + $0x50] sm:$0xff]
    %v1652 = vld [vmem:[#allocation3 + $0x58] sm:$0xff]
    %v1653 = vld [vmem:[#allocation3 + $0x60] sm:$0xff]
    %v1654 = vld [vmem:[#allocation3 + $0x68] sm:$0xff]
    %v1655 = vld [vmem:[#allocation3 + $0x70] sm:$0xff]
    %v1656 = vld [vmem:[#allocation3 + $0x78] sm:$0xff]
    %v1657 = vmul.f32 %v1641, %v1287
    %v1658 = vmul.f32 %v1642, %v1289
    %v1659 = vmul.f32 %v1643, %v1291
    %v1660 = vmul.f32 %v1644, %v1293
    %v1661 = vmul.f32 %v1645, %v1295
    %v1662 = vmul.f32 %v1646, %v1297
    %v1663 = vmul.f32 %v1647, %v1299
    %v1664 = vmul.f32 %v1648, %v1301
    %v1665 = vmul.f32 %v1649, %v1303
    %v1666 = vmul.f32 %v1650, %v1305
    %v1667 = vmul.f32 %v1651, %v1307
    %v1668 = vmul.f32 %v1652, %v1309
    %v1669 = vmul.f32 %v1653, %v1311
    %v1670 = vmul.f32 %v1654, %v1313
    %v1671 = vmul.f32 %v1655, %v1315
    %v1672 = vmul.f32 %v1656, %v1317
    %v1673 = vadd.f32 %v1657, %v1545
    %v1674 = vadd.f32 %v1658, %v1546
    %v1675 = vadd.f32 %v1659, %v1547
    %v1676 = vadd.f32 %v1660, %v1548
    %v1677 = vadd.f32 %v1661, %v1549
    %v1678 = vadd.f32 %v1662, %v1550
    %v1679 = vadd.f32 %v1663, %v1551
    %v1680 = vadd.f32 %v1664, %v1552
    %v1681 = vadd.f32 %v1665, %v1553
    %v1682 = vadd.f32 %v1666, %v1554
    %v1683 = vadd.f32 %v1667, %v1555
    %v1684 = vadd.f32 %v1668, %v1556
    %v1685 = vadd.f32 %v1669, %v1557
    %v1686 = vadd.f32 %v1670, %v1558
    %v1687 = vadd.f32 %v1671, %v1559
    %v1688 = vadd.f32 %v1672, %v1560
    %1689 = vst [vmem:[#allocation3] sm:$0xff] %v1673
    %1690 = vst [vmem:[#allocation3 + $0x8] sm:$0xff] %v1674
    %1691 = vst [vmem:[#allocation3 + $0x10] sm:$0xff] %v1675
    %1692 = vst [vmem:[#allocation3 + $0x18] sm:$0xff] %v1676
    %1693 = vst [vmem:[#allocation3 + $0x20] sm:$0xff] %v1677
    %1694 = vst [vmem:[#allocation3 + $0x28] sm:$0xff] %v1678
    %1695 = vst [vmem:[#allocation3 + $0x30] sm:$0xff] %v1679
    %1696 = vst [vmem:[#allocation3 + $0x38] sm:$0xff] %v1680
    %1697 = vst [vmem:[#allocation3 + $0x40] sm:$0xff] %v1681
    %1698 = vst [vmem:[#allocation3 + $0x48] sm:$0xff] %v1682
    %1699 = vst [vmem:[#allocation3 + $0x50] sm:$0xff] %v1683
    %1700 = vst [vmem:[#allocation3 + $0x58] sm:$0xff] %v1684
    %1701 = vst [vmem:[#allocation3 + $0x60] sm:$0xff] %v1685
    %1702 = vst [vmem:[#allocation3 + $0x68] sm:$0xff] %v1686
    %1703 = vst [vmem:[#allocation3 + $0x70] sm:$0xff] %v1687
    %1704 = vst [vmem:[#allocation3 + $0x78] sm:$0xff] %v1688
    %v1705 = vld [vmem:[#allocation4] sm:$0xff]
    %v1706 = vld [vmem:[#allocation4 + $0x8] sm:$0xff]
    %v1707 = vld [vmem:[#allocation4 + $0x10] sm:$0xff]
    %v1708 = vld [vmem:[#allocation4 + $0x18] sm:$0xff]
    %v1709 = vld [vmem:[#allocation4 + $0x20] sm:$0xff]
    %v1710 = vld [vmem:[#allocation4 + $0x28] sm:$0xff]
    %v1711 = vld [vmem:[#allocation4 + $0x30] sm:$0xff]
    %v1712 = vld [vmem:[#allocation4 + $0x38] sm:$0xff]
    %v1713 = vld [vmem:[#allocation4 + $0x40] sm:$0xff]
    %v1714 = vld [vmem:[#allocation4 + $0x48] sm:$0xff]
    %v1715 = vld [vmem:[#allocation4 + $0x50] sm:$0xff]
    %v1716 = vld [vmem:[#allocation4 + $0x58] sm:$0xff]
    %v1717 = vld [vmem:[#allocation4 + $0x60] sm:$0xff]
    %v1718 = vld [vmem:[#allocation4 + $0x68] sm:$0xff]
    %v1719 = vld [vmem:[#allocation4 + $0x70] sm:$0xff]
    %v1720 = vld [vmem:[#allocation4 + $0x78] sm:$0xff]
    %v1721 = vadd.f32 %v1705, %v1609
    %v1722 = vadd.f32 %v1706, %v1610
    %v1723 = vadd.f32 %v1707, %v1611
    %v1724 = vadd.f32 %v1708, %v1612
    %v1725 = vadd.f32 %v1709, %v1613
    %v1726 = vadd.f32 %v1710, %v1614
    %v1727 = vadd.f32 %v1711, %v1615
    %v1728 = vadd.f32 %v1712, %v1616
    %v1729 = vadd.f32 %v1713, %v1617
    %v1730 = vadd.f32 %v1714, %v1618
    %v1731 = vadd.f32 %v1715, %v1619
    %v1732 = vadd.f32 %v1716, %v1620
    %v1733 = vadd.f32 %v1717, %v1621
    %v1734 = vadd.f32 %v1718, %v1622
    %v1735 = vadd.f32 %v1719, %v1623
    %v1736 = vadd.f32 %v1720, %v1624
    %1737 = vst [vmem:[#allocation4] sm:$0xff] %v1721
    %1738 = vst [vmem:[#allocation4 + $0x8] sm:$0xff] %v1722
    %1739 = vst [vmem:[#allocation4 + $0x10] sm:$0xff] %v1723
    %1740 = vst [vmem:[#allocation4 + $0x18] sm:$0xff] %v1724
    %1741 = vst [vmem:[#allocation4 + $0x20] sm:$0xff] %v1725
    %1742 = vst [vmem:[#allocation4 + $0x28] sm:$0xff] %v1726
    %1743 = vst [vmem:[#allocation4 + $0x30] sm:$0xff] %v1727
    %1744 = vst [vmem:[#allocation4 + $0x38] sm:$0xff] %v1728
    %1745 = vst [vmem:[#allocation4 + $0x40] sm:$0xff] %v1729
    %1746 = vst [vmem:[#allocation4 + $0x48] sm:$0xff] %v1730
    %1747 = vst [vmem:[#allocation4 + $0x50] sm:$0xff] %v1731
    %1748 = vst [vmem:[#allocation4 + $0x58] sm:$0xff] %v1732
    %1749 = vst [vmem:[#allocation4 + $0x60] sm:$0xff] %v1733
    %1750 = vst [vmem:[#allocation4 + $0x68] sm:$0xff] %v1734
    %1751 = vst [vmem:[#allocation4 + $0x70] sm:$0xff] %v1735
    %1752 = vst [vmem:[#allocation4 + $0x78] sm:$0xff] %v1736
    %v1753 = vld [vmem:[#allocation5] sm:$0xff]
    %v1754 = vld [vmem:[#allocation5 + $0x8] sm:$0xff]
    %v1755 = vld [vmem:[#allocation5 + $0x10] sm:$0xff]
    %v1756 = vld [vmem:[#allocation5 + $0x18] sm:$0xff]
    %v1757 = vld [vmem:[#allocation5 + $0x20] sm:$0xff]
    %v1758 = vld [vmem:[#allocation5 + $0x28] sm:$0xff]
    %v1759 = vld [vmem:[#allocation5 + $0x30] sm:$0xff]
    %v1760 = vld [vmem:[#allocation5 + $0x38] sm:$0xff]
    %v1761 = vld [vmem:[#allocation5 + $0x40] sm:$0xff]
    %v1762 = vld [vmem:[#allocation5 + $0x48] sm:$0xff]
    %v1763 = vld [vmem:[#allocation5 + $0x50] sm:$0xff]
    %v1764 = vld [vmem:[#allocation5 + $0x58] sm:$0xff]
    %v1765 = vld [vmem:[#allocation5 + $0x60] sm:$0xff]
    %v1766 = vld [vmem:[#allocation5 + $0x68] sm:$0xff]
    %v1767 = vld [vmem:[#allocation5 + $0x70] sm:$0xff]
    %v1768 = vld [vmem:[#allocation5 + $0x78] sm:$0xff]
    %v1769 = vadd.f32 %v1753, %v1577
    %v1770 = vadd.f32 %v1754, %v1578
    %v1771 = vadd.f32 %v1755, %v1579
    %v1772 = vadd.f32 %v1756, %v1580
    %v1773 = vadd.f32 %v1757, %v1581
    %v1774 = vadd.f32 %v1758, %v1582
    %v1775 = vadd.f32 %v1759, %v1583
    %v1776 = vadd.f32 %v1760, %v1584
    %v1777 = vadd.f32 %v1761, %v1585
    %v1778 = vadd.f32 %v1762, %v1586
    %v1779 = vadd.f32 %v1763, %v1587
    %v1780 = vadd.f32 %v1764, %v1588
    %v1781 = vadd.f32 %v1765, %v1589
    %v1782 = vadd.f32 %v1766, %v1590
    %v1783 = vadd.f32 %v1767, %v1591
    %v1784 = vadd.f32 %v1768, %v1592
    %1785 = vst [vmem:[#allocation5] sm:$0xff] %v1769
    %1786 = vst [vmem:[#allocation5 + $0x8] sm:$0xff] %v1770
    %1787 = vst [vmem:[#allocation5 + $0x10] sm:$0xff] %v1771
    %1788 = vst [vmem:[#allocation5 + $0x18] sm:$0xff] %v1772
    %1789 = vst [vmem:[#allocation5 + $0x20] sm:$0xff] %v1773
    %1790 = vst [vmem:[#allocation5 + $0x28] sm:$0xff] %v1774
    %1791 = vst [vmem:[#allocation5 + $0x30] sm:$0xff] %v1775
    %1792 = vst [vmem:[#allocation5 + $0x38] sm:$0xff] %v1776
    %1793 = vst [vmem:[#allocation5 + $0x40] sm:$0xff] %v1777
    %1794 = vst [vmem:[#allocation5 + $0x48] sm:$0xff] %v1778
    %1795 = vst [vmem:[#allocation5 + $0x50] sm:$0xff] %v1779
    %1796 = vst [vmem:[#allocation5 + $0x58] sm:$0xff] %v1780
    %1797 = vst [vmem:[#allocation5 + $0x60] sm:$0xff] %v1781
    %1798 = vst [vmem:[#allocation5 + $0x68] sm:$0xff] %v1782
    %1799 = vst [vmem:[#allocation5 + $0x70] sm:$0xff] %v1783
    %1800 = vst [vmem:[#allocation5 + $0x78] sm:$0xff] %v1784
    %v1801 = vld [vmem:[#allocation6] sm:$0xff]
    %v1802 = vld [vmem:[#allocation6 + $0x8] sm:$0xff]
    %v1803 = vld [vmem:[#allocation6 + $0x10] sm:$0xff]
    %v1804 = vld [vmem:[#allocation6 + $0x18] sm:$0xff]
    %v1805 = vld [vmem:[#allocation6 + $0x20] sm:$0xff]
    %v1806 = vld [vmem:[#allocation6 + $0x28] sm:$0xff]
    %v1807 = vld [vmem:[#allocation6 + $0x30] sm:$0xff]
    %v1808 = vld [vmem:[#allocation6 + $0x38] sm:$0xff]
    %v1809 = vld [vmem:[#allocation6 + $0x40] sm:$0xff]
    %v1810 = vld [vmem:[#allocation6 + $0x48] sm:$0xff]
    %v1811 = vld [vmem:[#allocation6 + $0x50] sm:$0xff]
    %v1812 = vld [vmem:[#allocation6 + $0x58] sm:$0xff]
    %v1813 = vld [vmem:[#allocation6 + $0x60] sm:$0xff]
    %v1814 = vld [vmem:[#allocation6 + $0x68] sm:$0xff]
    %v1815 = vld [vmem:[#allocation6 + $0x70] sm:$0xff]
    %v1816 = vld [vmem:[#allocation6 + $0x78] sm:$0xff]
    %v1817 = vadd.f32 %v1801, %v1561
    %v1818 = vadd.f32 %v1802, %v1562
    %v1819 = vadd.f32 %v1803, %v1563
    %v1820 = vadd.f32 %v1804, %v1564
    %v1821 = vadd.f32 %v1805, %v1565
    %v1822 = vadd.f32 %v1806, %v1566
    %v1823 = vadd.f32 %v1807, %v1567
    %v1824 = vadd.f32 %v1808, %v1568
    %v1825 = vadd.f32 %v1809, %v1569
    %v1826 = vadd.f32 %v1810, %v1570
    %v1827 = vadd.f32 %v1811, %v1571
    %v1828 = vadd.f32 %v1812, %v1572
    %v1829 = vadd.f32 %v1813, %v1573
    %v1830 = vadd.f32 %v1814, %v1574
    %v1831 = vadd.f32 %v1815, %v1575
    %v1832 = vadd.f32 %v1816, %v1576
    %1833 = vst [vmem:[#allocation6] sm:$0xff] %v1817
    %1834 = vst [vmem:[#allocation6 + $0x8] sm:$0xff] %v1818
    %1835 = vst [vmem:[#allocation6 + $0x10] sm:$0xff] %v1819
    %1836 = vst [vmem:[#allocation6 + $0x18] sm:$0xff] %v1820
    %1837 = vst [vmem:[#allocation6 + $0x20] sm:$0xff] %v1821
    %1838 = vst [vmem:[#allocation6 + $0x28] sm:$0xff] %v1822
    %1839 = vst [vmem:[#allocation6 + $0x30] sm:$0xff] %v1823
    %1840 = vst [vmem:[#allocation6 + $0x38] sm:$0xff] %v1824
    %1841 = vst [vmem:[#allocation6 + $0x40] sm:$0xff] %v1825
    %1842 = vst [vmem:[#allocation6 + $0x48] sm:$0xff] %v1826
    %1843 = vst [vmem:[#allocation6 + $0x50] sm:$0xff] %v1827
    %1844 = vst [vmem:[#allocation6 + $0x58] sm:$0xff] %v1828
    %1845 = vst [vmem:[#allocation6 + $0x60] sm:$0xff] %v1829
    %1846 = vst [vmem:[#allocation6 + $0x68] sm:$0xff] %v1830
    %1847 = vst [vmem:[#allocation6 + $0x70] sm:$0xff] %v1831
    %1848 = vst [vmem:[#allocation6 + $0x78] sm:$0xff] %v1832
  $region37: #{tpu_custom_call.1} parent=0 // pred_fallthru
    _
  // Predicated region
  $region38: #{tpu_custom_call.1} parent=0 // pred_check
    %p1849 = pneg %p25
  $region39: #{tpu_custom_call.1} parent=0 // pred_check_branch
    %1851 = sbr.rel (%p1849) target = $region41
  $region40: #{tpu_custom_call.1} parent=0 // pred_region
    %v1852 = vld [vmem:[#allocation2] sm:$0xff]
    %v1853 = vld [vmem:[#allocation2 + $0x8] sm:$0xff]
    %v1854 = vld [vmem:[#allocation2 + $0x10] sm:$0xff]
    %v1855 = vld [vmem:[#allocation2 + $0x18] sm:$0xff]
    %v1856 = vld [vmem:[#allocation2 + $0x20] sm:$0xff]
    %v1857 = vld [vmem:[#allocation2 + $0x28] sm:$0xff]
    %v1858 = vld [vmem:[#allocation2 + $0x30] sm:$0xff]
    %v1859 = vld [vmem:[#allocation2 + $0x38] sm:$0xff]
    %v1860 = vld [vmem:[#allocation2 + $0x40] sm:$0xff]
    %v1861 = vld [vmem:[#allocation2 + $0x48] sm:$0xff]
    %v1862 = vld [vmem:[#allocation2 + $0x50] sm:$0xff]
    %v1863 = vld [vmem:[#allocation2 + $0x58] sm:$0xff]
    %v1864 = vld [vmem:[#allocation2 + $0x60] sm:$0xff]
    %v1865 = vld [vmem:[#allocation2 + $0x68] sm:$0xff]
    %v1866 = vld [vmem:[#allocation2 + $0x70] sm:$0xff]
    %v1867 = vld [vmem:[#allocation2 + $0x78] sm:$0xff]
    %1868 = vmax.xlane.f32.xlu0 %v1852
    %v1869 = vpop.xlane.xlu0 %1868
    %1870 = vmax.xlane.f32.xlu0 %v1853
    %v1871 = vpop.xlane.xlu0 %1870
    %1872 = vmax.xlane.f32.xlu0 %v1854
    %v1873 = vpop.xlane.xlu0 %1872
    %1874 = vmax.xlane.f32.xlu0 %v1855
    %v1875 = vpop.xlane.xlu0 %1874
    %1876 = vmax.xlane.f32.xlu0 %v1856
    %v1877 = vpop.xlane.xlu0 %1876
    %1878 = vmax.xlane.f32.xlu0 %v1857
    %v1879 = vpop.xlane.xlu0 %1878
    %1880 = vmax.xlane.f32.xlu0 %v1858
    %v1881 = vpop.xlane.xlu0 %1880
    %1882 = vmax.xlane.f32.xlu0 %v1859
    %v1883 = vpop.xlane.xlu0 %1882
    %1884 = vmax.xlane.f32.xlu0 %v1860
    %v1885 = vpop.xlane.xlu0 %1884
    %1886 = vmax.xlane.f32.xlu0 %v1861
    %v1887 = vpop.xlane.xlu0 %1886
    %1888 = vmax.xlane.f32.xlu0 %v1862
    %v1889 = vpop.xlane.xlu0 %1888
    %1890 = vmax.xlane.f32.xlu0 %v1863
    %v1891 = vpop.xlane.xlu0 %1890
    %1892 = vmax.xlane.f32.xlu0 %v1864
    %v1893 = vpop.xlane.xlu0 %1892
    %1894 = vmax.xlane.f32.xlu0 %v1865
    %v1895 = vpop.xlane.xlu0 %1894
    %1896 = vmax.xlane.f32.xlu0 %v1866
    %v1897 = vpop.xlane.xlu0 %1896
    %1898 = vmax.xlane.f32.xlu0 %v1867
    %v1899 = vpop.xlane.xlu0 %1898
    %v1900 = vld [vmem:[#allocation3] sm:$0xff]
    %v1901 = vld [vmem:[#allocation3 + $0x8] sm:$0xff]
    %v1902 = vld [vmem:[#allocation3 + $0x10] sm:$0xff]
    %v1903 = vld [vmem:[#allocation3 + $0x18] sm:$0xff]
    %v1904 = vld [vmem:[#allocation3 + $0x20] sm:$0xff]
    %v1905 = vld [vmem:[#allocation3 + $0x28] sm:$0xff]
    %v1906 = vld [vmem:[#allocation3 + $0x30] sm:$0xff]
    %v1907 = vld [vmem:[#allocation3 + $0x38] sm:$0xff]
    %v1908 = vld [vmem:[#allocation3 + $0x40] sm:$0xff]
    %v1909 = vld [vmem:[#allocation3 + $0x48] sm:$0xff]
    %v1910 = vld [vmem:[#allocation3 + $0x50] sm:$0xff]
    %v1911 = vld [vmem:[#allocation3 + $0x58] sm:$0xff]
    %v1912 = vld [vmem:[#allocation3 + $0x60] sm:$0xff]
    %v1913 = vld [vmem:[#allocation3 + $0x68] sm:$0xff]
    %v1914 = vld [vmem:[#allocation3 + $0x70] sm:$0xff]
    %v1915 = vld [vmem:[#allocation3 + $0x78] sm:$0xff]
    %v1916 = vsub.f32 %v1852, %v1869
    %v1917 = vsub.f32 %v1853, %v1871
    %v1918 = vsub.f32 %v1854, %v1873
    %v1919 = vsub.f32 %v1855, %v1875
    %v1920 = vsub.f32 %v1856, %v1877
    %v1921 = vsub.f32 %v1857, %v1879
    %v1922 = vsub.f32 %v1858, %v1881
    %v1923 = vsub.f32 %v1859, %v1883
    %v1924 = vsub.f32 %v1860, %v1885
    %v1925 = vsub.f32 %v1861, %v1887
    %v1926 = vsub.f32 %v1862, %v1889
    %v1927 = vsub.f32 %v1863, %v1891
    %v1928 = vsub.f32 %v1864, %v1893
    %v1929 = vsub.f32 %v1865, %v1895
    %v1930 = vsub.f32 %v1866, %v1897
    %v1931 = vsub.f32 %v1867, %v1899
    %v1932 = vmul.f32 %v1916, 1.442695
    %v1933 = vpow.pop %v1932
    %v1934 = vmul.f32 %v1917, 1.442695
    %v1935 = vpow.pop %v1934
    %v1936 = vmul.f32 %v1918, 1.442695
    %v1937 = vpow.pop %v1936
    %v1938 = vmul.f32 %v1919, 1.442695
    %v1939 = vpow.pop %v1938
    %v1940 = vmul.f32 %v1920, 1.442695
    %v1941 = vpow.pop %v1940
    %v1942 = vmul.f32 %v1921, 1.442695
    %v1943 = vpow.pop %v1942
    %v1944 = vmul.f32 %v1922, 1.442695
    %v1945 = vpow.pop %v1944
    %v1946 = vmul.f32 %v1923, 1.442695
    %v1947 = vpow.pop %v1946
    %v1948 = vmul.f32 %v1924, 1.442695
    %v1949 = vpow.pop %v1948
    %v1950 = vmul.f32 %v1925, 1.442695
    %v1951 = vpow.pop %v1950
    %v1952 = vmul.f32 %v1926, 1.442695
    %v1953 = vpow.pop %v1952
    %v1954 = vmul.f32 %v1927, 1.442695
    %v1955 = vpow.pop %v1954
    %v1956 = vmul.f32 %v1928, 1.442695
    %v1957 = vpow.pop %v1956
    %v1958 = vmul.f32 %v1929, 1.442695
    %v1959 = vpow.pop %v1958
    %v1960 = vmul.f32 %v1930, 1.442695
    %v1961 = vpow.pop %v1960
    %v1962 = vmul.f32 %v1931, 1.442695
    %v1963 = vpow.pop %v1962
    %v1964 = vmul.f32 %v1900, %v1933
    %v1965 = vmul.f32 %v1901, %v1935
    %v1966 = vmul.f32 %v1902, %v1937
    %v1967 = vmul.f32 %v1903, %v1939
    %v1968 = vmul.f32 %v1904, %v1941
    %v1969 = vmul.f32 %v1905, %v1943
    %v1970 = vmul.f32 %v1906, %v1945
    %v1971 = vmul.f32 %v1907, %v1947
    %v1972 = vmul.f32 %v1908, %v1949
    %v1973 = vmul.f32 %v1909, %v1951
    %v1974 = vmul.f32 %v1910, %v1953
    %v1975 = vmul.f32 %v1911, %v1955
    %v1976 = vmul.f32 %v1912, %v1957
    %v1977 = vmul.f32 %v1913, %v1959
    %v1978 = vmul.f32 %v1914, %v1961
    %v1979 = vmul.f32 %v1915, %v1963
    %1980 = vadd.xlane.f32.xlu0 %v1964
    %v1981 = vpop.xlane.xlu0 %1980
    %1982 = vadd.xlane.f32.xlu0 %v1965
    %v1983 = vpop.xlane.xlu0 %1982
    %1984 = vadd.xlane.f32.xlu0 %v1966
    %v1985 = vpop.xlane.xlu0 %1984
    %1986 = vadd.xlane.f32.xlu0 %v1967
    %v1987 = vpop.xlane.xlu0 %1986
    %1988 = vadd.xlane.f32.xlu0 %v1968
    %v1989 = vpop.xlane.xlu0 %1988
    %1990 = vadd.xlane.f32.xlu0 %v1969
    %v1991 = vpop.xlane.xlu0 %1990
    %1992 = vadd.xlane.f32.xlu0 %v1970
    %v1993 = vpop.xlane.xlu0 %1992
    %1994 = vadd.xlane.f32.xlu0 %v1971
    %v1995 = vpop.xlane.xlu0 %1994
    %1996 = vadd.xlane.f32.xlu0 %v1972
    %v1997 = vpop.xlane.xlu0 %1996
    %1998 = vadd.xlane.f32.xlu0 %v1973
    %v1999 = vpop.xlane.xlu0 %1998
    %2000 = vadd.xlane.f32.xlu0 %v1974
    %v2001 = vpop.xlane.xlu0 %2000
    %2002 = vadd.xlane.f32.xlu0 %v1975
    %v2003 = vpop.xlane.xlu0 %2002
    %2004 = vadd.xlane.f32.xlu0 %v1976
    %v2005 = vpop.xlane.xlu0 %2004
    %2006 = vadd.xlane.f32.xlu0 %v1977
    %v2007 = vpop.xlane.xlu0 %2006
    %2008 = vadd.xlane.f32.xlu0 %v1978
    %v2009 = vpop.xlane.xlu0 %2008
    %2010 = vadd.xlane.f32.xlu0 %v1979
    %v2011 = vpop.xlane.xlu0 %2010
    %v2012 = vld [vmem:[#allocation4] sm:$0xff]
    %v2013 = vld [vmem:[#allocation4 + $0x8] sm:$0xff]
    %v2014 = vld [vmem:[#allocation4 + $0x10] sm:$0xff]
    %v2015 = vld [vmem:[#allocation4 + $0x18] sm:$0xff]
    %v2016 = vld [vmem:[#allocation4 + $0x20] sm:$0xff]
    %v2017 = vld [vmem:[#allocation4 + $0x28] sm:$0xff]
    %v2018 = vld [vmem:[#allocation4 + $0x30] sm:$0xff]
    %v2019 = vld [vmem:[#allocation4 + $0x38] sm:$0xff]
    %v2020 = vld [vmem:[#allocation4 + $0x40] sm:$0xff]
    %v2021 = vld [vmem:[#allocation4 + $0x48] sm:$0xff]
    %v2022 = vld [vmem:[#allocation4 + $0x50] sm:$0xff]
    %v2023 = vld [vmem:[#allocation4 + $0x58] sm:$0xff]
    %v2024 = vld [vmem:[#allocation4 + $0x60] sm:$0xff]
    %v2025 = vld [vmem:[#allocation4 + $0x68] sm:$0xff]
    %v2026 = vld [vmem:[#allocation4 + $0x70] sm:$0xff]
    %v2027 = vld [vmem:[#allocation4 + $0x78] sm:$0xff]
    %2028 = vadd.xlane.f32.xlu0 %v2012
    %v2029 = vpop.xlane.xlu0 %2028
    %2030 = vadd.xlane.f32.xlu0 %v2013
    %v2031 = vpop.xlane.xlu0 %2030
    %2032 = vadd.xlane.f32.xlu0 %v2014
    %v2033 = vpop.xlane.xlu0 %2032
    %2034 = vadd.xlane.f32.xlu0 %v2015
    %v2035 = vpop.xlane.xlu0 %2034
    %2036 = vadd.xlane.f32.xlu0 %v2016
    %v2037 = vpop.xlane.xlu0 %2036
    %2038 = vadd.xlane.f32.xlu0 %v2017
    %v2039 = vpop.xlane.xlu0 %2038
    %2040 = vadd.xlane.f32.xlu0 %v2018
    %v2041 = vpop.xlane.xlu0 %2040
    %2042 = vadd.xlane.f32.xlu0 %v2019
    %v2043 = vpop.xlane.xlu0 %2042
    %2044 = vadd.xlane.f32.xlu0 %v2020
    %v2045 = vpop.xlane.xlu0 %2044
    %2046 = vadd.xlane.f32.xlu0 %v2021
    %v2047 = vpop.xlane.xlu0 %2046
    %2048 = vadd.xlane.f32.xlu0 %v2022
    %v2049 = vpop.xlane.xlu0 %2048
    %2050 = vadd.xlane.f32.xlu0 %v2023
    %v2051 = vpop.xlane.xlu0 %2050
    %2052 = vadd.xlane.f32.xlu0 %v2024
    %v2053 = vpop.xlane.xlu0 %2052
    %2054 = vadd.xlane.f32.xlu0 %v2025
    %v2055 = vpop.xlane.xlu0 %2054
    %2056 = vadd.xlane.f32.xlu0 %v2026
    %v2057 = vpop.xlane.xlu0 %2056
    %2058 = vadd.xlane.f32.xlu0 %v2027
    %v2059 = vpop.xlane.xlu0 %2058
    %v2060 = vld [vmem:[#allocation5] sm:$0xff]
    %v2061 = vld [vmem:[#allocation5 + $0x8] sm:$0xff]
    %v2062 = vld [vmem:[#allocation5 + $0x10] sm:$0xff]
    %v2063 = vld [vmem:[#allocation5 + $0x18] sm:$0xff]
    %v2064 = vld [vmem:[#allocation5 + $0x20] sm:$0xff]
    %v2065 = vld [vmem:[#allocation5 + $0x28] sm:$0xff]
    %v2066 = vld [vmem:[#allocation5 + $0x30] sm:$0xff]
    %v2067 = vld [vmem:[#allocation5 + $0x38] sm:$0xff]
    %v2068 = vld [vmem:[#allocation5 + $0x40] sm:$0xff]
    %v2069 = vld [vmem:[#allocation5 + $0x48] sm:$0xff]
    %v2070 = vld [vmem:[#allocation5 + $0x50] sm:$0xff]
    %v2071 = vld [vmem:[#allocation5 + $0x58] sm:$0xff]
    %v2072 = vld [vmem:[#allocation5 + $0x60] sm:$0xff]
    %v2073 = vld [vmem:[#allocation5 + $0x68] sm:$0xff]
    %v2074 = vld [vmem:[#allocation5 + $0x70] sm:$0xff]
    %v2075 = vld [vmem:[#allocation5 + $0x78] sm:$0xff]
    %2076 = vadd.xlane.f32.xlu0 %v2060
    %v2077 = vpop.xlane.xlu0 %2076
    %2078 = vadd.xlane.f32.xlu0 %v2061
    %v2079 = vpop.xlane.xlu0 %2078
    %2080 = vadd.xlane.f32.xlu0 %v2062
    %v2081 = vpop.xlane.xlu0 %2080
    %2082 = vadd.xlane.f32.xlu0 %v2063
    %v2083 = vpop.xlane.xlu0 %2082
    %2084 = vadd.xlane.f32.xlu0 %v2064
    %v2085 = vpop.xlane.xlu0 %2084
    %2086 = vadd.xlane.f32.xlu0 %v2065
    %v2087 = vpop.xlane.xlu0 %2086
    %2088 = vadd.xlane.f32.xlu0 %v2066
    %v2089 = vpop.xlane.xlu0 %2088
    %2090 = vadd.xlane.f32.xlu0 %v2067
    %v2091 = vpop.xlane.xlu0 %2090
    %2092 = vadd.xlane.f32.xlu0 %v2068
    %v2093 = vpop.xlane.xlu0 %2092
    %2094 = vadd.xlane.f32.xlu0 %v2069
    %v2095 = vpop.xlane.xlu0 %2094
    %2096 = vadd.xlane.f32.xlu0 %v2070
    %v2097 = vpop.xlane.xlu0 %2096
    %2098 = vadd.xlane.f32.xlu0 %v2071
    %v2099 = vpop.xlane.xlu0 %2098
    %2100 = vadd.xlane.f32.xlu0 %v2072
    %v2101 = vpop.xlane.xlu0 %2100
    %2102 = vadd.xlane.f32.xlu0 %v2073
    %v2103 = vpop.xlane.xlu0 %2102
    %2104 = vadd.xlane.f32.xlu0 %v2074
    %v2105 = vpop.xlane.xlu0 %2104
    %2106 = vadd.xlane.f32.xlu0 %v2075
    %v2107 = vpop.xlane.xlu0 %2106
    %v2108 = vld [vmem:[#allocation6] sm:$0xff]
    %v2109 = vld [vmem:[#allocation6 + $0x8] sm:$0xff]
    %v2110 = vld [vmem:[#allocation6 + $0x10] sm:$0xff]
    %v2111 = vld [vmem:[#allocation6 + $0x18] sm:$0xff]
    %v2112 = vld [vmem:[#allocation6 + $0x20] sm:$0xff]
    %v2113 = vld [vmem:[#allocation6 + $0x28] sm:$0xff]
    %v2114 = vld [vmem:[#allocation6 + $0x30] sm:$0xff]
    %v2115 = vld [vmem:[#allocation6 + $0x38] sm:$0xff]
    %v2116 = vld [vmem:[#allocation6 + $0x40] sm:$0xff]
    %v2117 = vld [vmem:[#allocation6 + $0x48] sm:$0xff]
    %v2118 = vld [vmem:[#allocation6 + $0x50] sm:$0xff]
    %v2119 = vld [vmem:[#allocation6 + $0x58] sm:$0xff]
    %v2120 = vld [vmem:[#allocation6 + $0x60] sm:$0xff]
    %v2121 = vld [vmem:[#allocation6 + $0x68] sm:$0xff]
    %v2122 = vld [vmem:[#allocation6 + $0x70] sm:$0xff]
    %v2123 = vld [vmem:[#allocation6 + $0x78] sm:$0xff]
    %2124 = vadd.xlane.f32.xlu0 %v2108
    %v2125 = vpop.xlane.xlu0 %2124
    %2126 = vadd.xlane.f32.xlu0 %v2109
    %v2127 = vpop.xlane.xlu0 %2126
    %2128 = vadd.xlane.f32.xlu0 %v2110
    %v2129 = vpop.xlane.xlu0 %2128
    %2130 = vadd.xlane.f32.xlu0 %v2111
    %v2131 = vpop.xlane.xlu0 %2130
    %2132 = vadd.xlane.f32.xlu0 %v2112
    %v2133 = vpop.xlane.xlu0 %2132
    %2134 = vadd.xlane.f32.xlu0 %v2113
    %v2135 = vpop.xlane.xlu0 %2134
    %2136 = vadd.xlane.f32.xlu0 %v2114
    %v2137 = vpop.xlane.xlu0 %2136
    %2138 = vadd.xlane.f32.xlu0 %v2115
    %v2139 = vpop.xlane.xlu0 %2138
    %2140 = vadd.xlane.f32.xlu0 %v2116
    %v2141 = vpop.xlane.xlu0 %2140
    %2142 = vadd.xlane.f32.xlu0 %v2117
    %v2143 = vpop.xlane.xlu0 %2142
    %2144 = vadd.xlane.f32.xlu0 %v2118
    %v2145 = vpop.xlane.xlu0 %2144
    %2146 = vadd.xlane.f32.xlu0 %v2119
    %v2147 = vpop.xlane.xlu0 %2146
    %2148 = vadd.xlane.f32.xlu0 %v2120
    %v2149 = vpop.xlane.xlu0 %2148
    %2150 = vadd.xlane.f32.xlu0 %v2121
    %v2151 = vpop.xlane.xlu0 %2150
    %2152 = vadd.xlane.f32.xlu0 %v2122
    %v2153 = vpop.xlane.xlu0 %2152
    %2154 = vadd.xlane.f32.xlu0 %v2123
    %v2155 = vpop.xlane.xlu0 %2154
    %v2156 = vadd.f32 %v1981, 1e-08
    %v2157 = vadd.f32 %v1983, 1e-08
    %v2158 = vadd.f32 %v1985, 1e-08
    %v2159 = vadd.f32 %v1987, 1e-08
    %v2160 = vadd.f32 %v1989, 1e-08
    %v2161 = vadd.f32 %v1991, 1e-08
    %v2162 = vadd.f32 %v1993, 1e-08
    %v2163 = vadd.f32 %v1995, 1e-08
    %v2164 = vadd.f32 %v1997, 1e-08
    %v2165 = vadd.f32 %v1999, 1e-08
    %v2166 = vadd.f32 %v2001, 1e-08
    %v2167 = vadd.f32 %v2003, 1e-08
    %v2168 = vadd.f32 %v2005, 1e-08
    %v2169 = vadd.f32 %v2007, 1e-08
    %v2170 = vadd.f32 %v2009, 1e-08
    %v2171 = vadd.f32 %v2011, 1e-08
    %v2172 = vlog2.pop %v2156
    %v2173 = vmul.f32 %v2172, 0.6931472
    %v2174 = vlog2.pop %v2157
    %v2175 = vmul.f32 %v2174, 0.6931472
    %v2176 = vlog2.pop %v2158
    %v2177 = vmul.f32 %v2176, 0.6931472
    %v2178 = vlog2.pop %v2159
    %v2179 = vmul.f32 %v2178, 0.6931472
    %v2180 = vlog2.pop %v2160
    %v2181 = vmul.f32 %v2180, 0.6931472
    %v2182 = vlog2.pop %v2161
    %v2183 = vmul.f32 %v2182, 0.6931472
    %v2184 = vlog2.pop %v2162
    %v2185 = vmul.f32 %v2184, 0.6931472
    %v2186 = vlog2.pop %v2163
    %v2187 = vmul.f32 %v2186, 0.6931472
    %v2188 = vlog2.pop %v2164
    %v2189 = vmul.f32 %v2188, 0.6931472
    %v2190 = vlog2.pop %v2165
    %v2191 = vmul.f32 %v2190, 0.6931472
    %v2192 = vlog2.pop %v2166
    %v2193 = vmul.f32 %v2192, 0.6931472
    %v2194 = vlog2.pop %v2167
    %v2195 = vmul.f32 %v2194, 0.6931472
    %v2196 = vlog2.pop %v2168
    %v2197 = vmul.f32 %v2196, 0.6931472
    %v2198 = vlog2.pop %v2169
    %v2199 = vmul.f32 %v2198, 0.6931472
    %v2200 = vlog2.pop %v2170
    %v2201 = vmul.f32 %v2200, 0.6931472
    %v2202 = vlog2.pop %v2171
    %v2203 = vmul.f32 %v2202, 0.6931472
    %v2204 = vadd.f32 %v1869, %v2173
    %v2205 = vadd.f32 %v1871, %v2175
    %v2206 = vadd.f32 %v1873, %v2177
    %v2207 = vadd.f32 %v1875, %v2179
    %v2208 = vadd.f32 %v1877, %v2181
    %v2209 = vadd.f32 %v1879, %v2183
    %v2210 = vadd.f32 %v1881, %v2185
    %v2211 = vadd.f32 %v1883, %v2187
    %v2212 = vadd.f32 %v1885, %v2189
    %v2213 = vadd.f32 %v1887, %v2191
    %v2214 = vadd.f32 %v1889, %v2193
    %v2215 = vadd.f32 %v1891, %v2195
    %v2216 = vadd.f32 %v1893, %v2197
    %v2217 = vadd.f32 %v1895, %v2199
    %v2218 = vadd.f32 %v1897, %v2201
    %v2219 = vadd.f32 %v1899, %v2203
    %v2220 = vmul.f32 %v2204, %v2077
    %v2221 = vmul.f32 %v2205, %v2079
    %v2222 = vmul.f32 %v2206, %v2081
    %v2223 = vmul.f32 %v2207, %v2083
    %v2224 = vmul.f32 %v2208, %v2085
    %v2225 = vmul.f32 %v2209, %v2087
    %v2226 = vmul.f32 %v2210, %v2089
    %v2227 = vmul.f32 %v2211, %v2091
    %v2228 = vmul.f32 %v2212, %v2093
    %v2229 = vmul.f32 %v2213, %v2095
    %v2230 = vmul.f32 %v2214, %v2097
    %v2231 = vmul.f32 %v2215, %v2099
    %v2232 = vmul.f32 %v2216, %v2101
    %v2233 = vmul.f32 %v2217, %v2103
    %v2234 = vmul.f32 %v2218, %v2105
    %v2235 = vmul.f32 %v2219, %v2107
    %v2236 = vsub.f32 %v2029, %v2220
    %v2237 = vsub.f32 %v2031, %v2221
    %v2238 = vsub.f32 %v2033, %v2222
    %v2239 = vsub.f32 %v2035, %v2223
    %v2240 = vsub.f32 %v2037, %v2224
    %v2241 = vsub.f32 %v2039, %v2225
    %v2242 = vsub.f32 %v2041, %v2226
    %v2243 = vsub.f32 %v2043, %v2227
    %v2244 = vsub.f32 %v2045, %v2228
    %v2245 = vsub.f32 %v2047, %v2229
    %v2246 = vsub.f32 %v2049, %v2230
    %v2247 = vsub.f32 %v2051, %v2231
    %v2248 = vsub.f32 %v2053, %v2232
    %v2249 = vsub.f32 %v2055, %v2233
    %v2250 = vsub.f32 %v2057, %v2234
    %v2251 = vsub.f32 %v2059, %v2235
    %v2252 = vadd.f32 %v2125, 1e-08
    %v2253 = vadd.f32 %v2127, 1e-08
    %v2254 = vadd.f32 %v2129, 1e-08
    %v2255 = vadd.f32 %v2131, 1e-08
    %v2256 = vadd.f32 %v2133, 1e-08
    %v2257 = vadd.f32 %v2135, 1e-08
    %v2258 = vadd.f32 %v2137, 1e-08
    %v2259 = vadd.f32 %v2139, 1e-08
    %v2260 = vadd.f32 %v2141, 1e-08
    %v2261 = vadd.f32 %v2143, 1e-08
    %v2262 = vadd.f32 %v2145, 1e-08
    %v2263 = vadd.f32 %v2147, 1e-08
    %v2264 = vadd.f32 %v2149, 1e-08
    %v2265 = vadd.f32 %v2151, 1e-08
    %v2266 = vadd.f32 %v2153, 1e-08
    %v2267 = vadd.f32 %v2155, 1e-08
    %v2268 = vrcp.pop %v2252
    %v2269 = vmul.f32 %v2252, %v2268
    %v2270 = vsub.f32 1.0, %v2269
    %v2271 = vmul.f32 %v2268, %v2270
    %v2272 = vadd.f32 %v2268, %v2271
    %vm2273 = vweird.f32 %v2252
    %vm2274 = vweird.f32 %v2268
    %vm2275 = vmor %vm2273, %vm2274
    %v2276 = vsel %vm2275, %v2268, %v2272
    %v2277 = vand.u32 2147483647, %v2252
    %vm2278 = vcmp.eq.f32.partialorder %v2277, 8.507059e+37
    %v2279 = vand.u32 %v2252, 2147483648
    %v2280 = vor.u32 1.1754944e-38, %v2279
    %v2281 = vsel %vm2278, %v2280, %v2276
    %v2282 = vmul.f32 %v2236, %v2281
    %v2283 = vrcp.pop %v2253
    %v2284 = vmul.f32 %v2253, %v2283
    %v2285 = vsub.f32 1.0, %v2284
    %v2286 = vmul.f32 %v2283, %v2285
    %v2287 = vadd.f32 %v2283, %v2286
    %vm2288 = vweird.f32 %v2253
    %vm2289 = vweird.f32 %v2283
    %vm2290 = vmor %vm2288, %vm2289
    %v2291 = vsel %vm2290, %v2283, %v2287
    %v2292 = vand.u32 2147483647, %v2253
    %vm2293 = vcmp.eq.f32.partialorder %v2292, 8.507059e+37
    %v2294 = vand.u32 %v2253, 2147483648
    %v2295 = vor.u32 1.1754944e-38, %v2294
    %v2296 = vsel %vm2293, %v2295, %v2291
    %v2297 = vmul.f32 %v2237, %v2296
    %v2298 = vrcp.pop %v2254
    %v2299 = vmul.f32 %v2254, %v2298
    %v2300 = vsub.f32 1.0, %v2299
    %v2301 = vmul.f32 %v2298, %v2300
    %v2302 = vadd.f32 %v2298, %v2301
    %vm2303 = vweird.f32 %v2254
    %vm2304 = vweird.f32 %v2298
    %vm2305 = vmor %vm2303, %vm2304
    %v2306 = vsel %vm2305, %v2298, %v2302
    %v2307 = vand.u32 2147483647, %v2254
    %vm2308 = vcmp.eq.f32.partialorder %v2307, 8.507059e+37
    %v2309 = vand.u32 %v2254, 2147483648
    %v2310 = vor.u32 1.1754944e-38, %v2309
    %v2311 = vsel %vm2308, %v2310, %v2306
    %v2312 = vmul.f32 %v2238, %v2311
    %v2313 = vrcp.pop %v2255
    %v2314 = vmul.f32 %v2255, %v2313
    %v2315 = vsub.f32 1.0, %v2314
    %v2316 = vmul.f32 %v2313, %v2315
    %v2317 = vadd.f32 %v2313, %v2316
    %vm2318 = vweird.f32 %v2255
    %vm2319 = vweird.f32 %v2313
    %vm2320 = vmor %vm2318, %vm2319
    %v2321 = vsel %vm2320, %v2313, %v2317
    %v2322 = vand.u32 2147483647, %v2255
    %vm2323 = vcmp.eq.f32.partialorder %v2322, 8.507059e+37
    %v2324 = vand.u32 %v2255, 2147483648
    %v2325 = vor.u32 1.1754944e-38, %v2324
    %v2326 = vsel %vm2323, %v2325, %v2321
    %v2327 = vmul.f32 %v2239, %v2326
    %v2328 = vrcp.pop %v2256
    %v2329 = vmul.f32 %v2256, %v2328
    %v2330 = vsub.f32 1.0, %v2329
    %v2331 = vmul.f32 %v2328, %v2330
    %v2332 = vadd.f32 %v2328, %v2331
    %vm2333 = vweird.f32 %v2256
    %vm2334 = vweird.f32 %v2328
    %vm2335 = vmor %vm2333, %vm2334
    %v2336 = vsel %vm2335, %v2328, %v2332
    %v2337 = vand.u32 2147483647, %v2256
    %vm2338 = vcmp.eq.f32.partialorder %v2337, 8.507059e+37
    %v2339 = vand.u32 %v2256, 2147483648
    %v2340 = vor.u32 1.1754944e-38, %v2339
    %v2341 = vsel %vm2338, %v2340, %v2336
    %v2342 = vmul.f32 %v2240, %v2341
    %v2343 = vrcp.pop %v2257
    %v2344 = vmul.f32 %v2257, %v2343
    %v2345 = vsub.f32 1.0, %v2344
    %v2346 = vmul.f32 %v2343, %v2345
    %v2347 = vadd.f32 %v2343, %v2346
    %vm2348 = vweird.f32 %v2257
    %vm2349 = vweird.f32 %v2343
    %vm2350 = vmor %vm2348, %vm2349
    %v2351 = vsel %vm2350, %v2343, %v2347
    %v2352 = vand.u32 2147483647, %v2257
    %vm2353 = vcmp.eq.f32.partialorder %v2352, 8.507059e+37
    %v2354 = vand.u32 %v2257, 2147483648
    %v2355 = vor.u32 1.1754944e-38, %v2354
    %v2356 = vsel %vm2353, %v2355, %v2351
    %v2357 = vmul.f32 %v2241, %v2356
    %v2358 = vrcp.pop %v2258
    %v2359 = vmul.f32 %v2258, %v2358
    %v2360 = vsub.f32 1.0, %v2359
    %v2361 = vmul.f32 %v2358, %v2360
    %v2362 = vadd.f32 %v2358, %v2361
    %vm2363 = vweird.f32 %v2258
    %vm2364 = vweird.f32 %v2358
    %vm2365 = vmor %vm2363, %vm2364
    %v2366 = vsel %vm2365, %v2358, %v2362
    %v2367 = vand.u32 2147483647, %v2258
    %vm2368 = vcmp.eq.f32.partialorder %v2367, 8.507059e+37
    %v2369 = vand.u32 %v2258, 2147483648
    %v2370 = vor.u32 1.1754944e-38, %v2369
    %v2371 = vsel %vm2368, %v2370, %v2366
    %v2372 = vmul.f32 %v2242, %v2371
    %v2373 = vrcp.pop %v2259
    %v2374 = vmul.f32 %v2259, %v2373
    %v2375 = vsub.f32 1.0, %v2374
    %v2376 = vmul.f32 %v2373, %v2375
    %v2377 = vadd.f32 %v2373, %v2376
    %vm2378 = vweird.f32 %v2259
    %vm2379 = vweird.f32 %v2373
    %vm2380 = vmor %vm2378, %vm2379
    %v2381 = vsel %vm2380, %v2373, %v2377
    %v2382 = vand.u32 2147483647, %v2259
    %vm2383 = vcmp.eq.f32.partialorder %v2382, 8.507059e+37
    %v2384 = vand.u32 %v2259, 2147483648
    %v2385 = vor.u32 1.1754944e-38, %v2384
    %v2386 = vsel %vm2383, %v2385, %v2381
    %v2387 = vmul.f32 %v2243, %v2386
    %v2388 = vrcp.pop %v2260
    %v2389 = vmul.f32 %v2260, %v2388
    %v2390 = vsub.f32 1.0, %v2389
    %v2391 = vmul.f32 %v2388, %v2390
    %v2392 = vadd.f32 %v2388, %v2391
    %vm2393 = vweird.f32 %v2260
    %vm2394 = vweird.f32 %v2388
    %vm2395 = vmor %vm2393, %vm2394
    %v2396 = vsel %vm2395, %v2388, %v2392
    %v2397 = vand.u32 2147483647, %v2260
    %vm2398 = vcmp.eq.f32.partialorder %v2397, 8.507059e+37
    %v2399 = vand.u32 %v2260, 2147483648
    %v2400 = vor.u32 1.1754944e-38, %v2399
    %v2401 = vsel %vm2398, %v2400, %v2396
    %v2402 = vmul.f32 %v2244, %v2401
    %v2403 = vrcp.pop %v2261
    %v2404 = vmul.f32 %v2261, %v2403
    %v2405 = vsub.f32 1.0, %v2404
    %v2406 = vmul.f32 %v2403, %v2405
    %v2407 = vadd.f32 %v2403, %v2406
    %vm2408 = vweird.f32 %v2261
    %vm2409 = vweird.f32 %v2403
    %vm2410 = vmor %vm2408, %vm2409
    %v2411 = vsel %vm2410, %v2403, %v2407
    %v2412 = vand.u32 2147483647, %v2261
    %vm2413 = vcmp.eq.f32.partialorder %v2412, 8.507059e+37
    %v2414 = vand.u32 %v2261, 2147483648
    %v2415 = vor.u32 1.1754944e-38, %v2414
    %v2416 = vsel %vm2413, %v2415, %v2411
    %v2417 = vmul.f32 %v2245, %v2416
    %v2418 = vrcp.pop %v2262
    %v2419 = vmul.f32 %v2262, %v2418
    %v2420 = vsub.f32 1.0, %v2419
    %v2421 = vmul.f32 %v2418, %v2420
    %v2422 = vadd.f32 %v2418, %v2421
    %vm2423 = vweird.f32 %v2262
    %vm2424 = vweird.f32 %v2418
    %vm2425 = vmor %vm2423, %vm2424
    %v2426 = vsel %vm2425, %v2418, %v2422
    %v2427 = vand.u32 2147483647, %v2262
    %vm2428 = vcmp.eq.f32.partialorder %v2427, 8.507059e+37
    %v2429 = vand.u32 %v2262, 2147483648
    %v2430 = vor.u32 1.1754944e-38, %v2429
    %v2431 = vsel %vm2428, %v2430, %v2426
    %v2432 = vmul.f32 %v2246, %v2431
    %v2433 = vrcp.pop %v2263
    %v2434 = vmul.f32 %v2263, %v2433
    %v2435 = vsub.f32 1.0, %v2434
    %v2436 = vmul.f32 %v2433, %v2435
    %v2437 = vadd.f32 %v2433, %v2436
    %vm2438 = vweird.f32 %v2263
    %vm2439 = vweird.f32 %v2433
    %vm2440 = vmor %vm2438, %vm2439
    %v2441 = vsel %vm2440, %v2433, %v2437
    %v2442 = vand.u32 2147483647, %v2263
    %vm2443 = vcmp.eq.f32.partialorder %v2442, 8.507059e+37
    %v2444 = vand.u32 %v2263, 2147483648
    %v2445 = vor.u32 1.1754944e-38, %v2444
    %v2446 = vsel %vm2443, %v2445, %v2441
    %v2447 = vmul.f32 %v2247, %v2446
    %v2448 = vrcp.pop %v2264
    %v2449 = vmul.f32 %v2264, %v2448
    %v2450 = vsub.f32 1.0, %v2449
    %v2451 = vmul.f32 %v2448, %v2450
    %v2452 = vadd.f32 %v2448, %v2451
    %vm2453 = vweird.f32 %v2264
    %vm2454 = vweird.f32 %v2448
    %vm2455 = vmor %vm2453, %vm2454
    %v2456 = vsel %vm2455, %v2448, %v2452
    %v2457 = vand.u32 2147483647, %v2264
    %vm2458 = vcmp.eq.f32.partialorder %v2457, 8.507059e+37
    %v2459 = vand.u32 %v2264, 2147483648
    %v2460 = vor.u32 1.1754944e-38, %v2459
    %v2461 = vsel %vm2458, %v2460, %v2456
    %v2462 = vmul.f32 %v2248, %v2461
    %v2463 = vrcp.pop %v2265
    %v2464 = vmul.f32 %v2265, %v2463
    %v2465 = vsub.f32 1.0, %v2464
    %v2466 = vmul.f32 %v2463, %v2465
    %v2467 = vadd.f32 %v2463, %v2466
    %vm2468 = vweird.f32 %v2265
    %vm2469 = vweird.f32 %v2463
    %vm2470 = vmor %vm2468, %vm2469
    %v2471 = vsel %vm2470, %v2463, %v2467
    %v2472 = vand.u32 2147483647, %v2265
    %vm2473 = vcmp.eq.f32.partialorder %v2472, 8.507059e+37
    %v2474 = vand.u32 %v2265, 2147483648
    %v2475 = vor.u32 1.1754944e-38, %v2474
    %v2476 = vsel %vm2473, %v2475, %v2471
    %v2477 = vmul.f32 %v2249, %v2476
    %v2478 = vrcp.pop %v2266
    %v2479 = vmul.f32 %v2266, %v2478
    %v2480 = vsub.f32 1.0, %v2479
    %v2481 = vmul.f32 %v2478, %v2480
    %v2482 = vadd.f32 %v2478, %v2481
    %vm2483 = vweird.f32 %v2266
    %vm2484 = vweird.f32 %v2478
    %vm2485 = vmor %vm2483, %vm2484
    %v2486 = vsel %vm2485, %v2478, %v2482
    %v2487 = vand.u32 2147483647, %v2266
    %vm2488 = vcmp.eq.f32.partialorder %v2487, 8.507059e+37
    %v2489 = vand.u32 %v2266, 2147483648
    %v2490 = vor.u32 1.1754944e-38, %v2489
    %v2491 = vsel %vm2488, %v2490, %v2486
    %v2492 = vmul.f32 %v2250, %v2491
    %v2493 = vrcp.pop %v2267
    %v2494 = vmul.f32 %v2267, %v2493
    %v2495 = vsub.f32 1.0, %v2494
    %v2496 = vmul.f32 %v2493, %v2495
    %v2497 = vadd.f32 %v2493, %v2496
    %vm2498 = vweird.f32 %v2267
    %vm2499 = vweird.f32 %v2493
    %vm2500 = vmor %vm2498, %vm2499
    %v2501 = vsel %vm2500, %v2493, %v2497
    %v2502 = vand.u32 2147483647, %v2267
    %vm2503 = vcmp.eq.f32.partialorder %v2502, 8.507059e+37
    %v2504 = vand.u32 %v2267, 2147483648
    %v2505 = vor.u32 1.1754944e-38, %v2504
    %v2506 = vsel %vm2503, %v2505, %v2501
    %v2507 = vmul.f32 %v2251, %v2506
    %vm2508 = vcmask 7168
    %2509 = vst.msk [vmem:[%s6] sm:$0xff] %vm2508, %v2282
    %2510 = vst.msk [vmem:[%s6 + $0x8] sm:$0xff] %vm2508, %v2297
    %2511 = vst.msk [vmem:[%s6 + $0x10] sm:$0xff] %vm2508, %v2312
    %2512 = vst.msk [vmem:[%s6 + $0x18] sm:$0xff] %vm2508, %v2327
    %2513 = vst.msk [vmem:[%s6 + $0x20] sm:$0xff] %vm2508, %v2342
    %2514 = vst.msk [vmem:[%s6 + $0x28] sm:$0xff] %vm2508, %v2357
    %2515 = vst.msk [vmem:[%s6 + $0x30] sm:$0xff] %vm2508, %v2372
    %2516 = vst.msk [vmem:[%s6 + $0x38] sm:$0xff] %vm2508, %v2387
    %2517 = vst.msk [vmem:[%s6 + $0x40] sm:$0xff] %vm2508, %v2402
    %2518 = vst.msk [vmem:[%s6 + $0x48] sm:$0xff] %vm2508, %v2417
    %2519 = vst.msk [vmem:[%s6 + $0x50] sm:$0xff] %vm2508, %v2432
    %2520 = vst.msk [vmem:[%s6 + $0x58] sm:$0xff] %vm2508, %v2447
    %2521 = vst.msk [vmem:[%s6 + $0x60] sm:$0xff] %vm2508, %v2462
    %2522 = vst.msk [vmem:[%s6 + $0x68] sm:$0xff] %vm2508, %v2477
    %2523 = vst.msk [vmem:[%s6 + $0x70] sm:$0xff] %vm2508, %v2492
    %2524 = vst.msk [vmem:[%s6 + $0x78] sm:$0xff] %vm2508, %v2507
  $region41: #{tpu_custom_call.1} parent=0 // pred_fallthru
    _
  // Predicated region
  $region42: #{tpu_custom_call.1} parent=0 // pred_check
    _
  $region43: #{tpu_custom_call.1} parent=0 // pred_check_branch
    %2526 = sbr.rel (0) target = $region45
  $region44: #{tpu_custom_call.1} parent=0 // pred_region
    _
  $region45: #{tpu_custom_call.1} parent=0 // pred_fallthru
    _
  // Predicated region
  $region46: #{tpu_custom_call.1} parent=0 // pred_check
    _
  $region47: #{tpu_custom_call.1} parent=0 // pred_check_branch
    %2528 = sbr.rel (0) target = $region49
  $region48: #{tpu_custom_call.1} parent=0 // pred_region
    _
  $region49: #{tpu_custom_call.1} parent=0 // pred_fallthru
    _

</llo_original>
